<compile_context>
chip_gen: v7x
topology: tpu7x:2x2x1
jax: 0.10.0
libtpu: 0.0.40
codegen_flags: <defaults>
</compile_context>

<pallas_src>
import functools

import jax
import jax.numpy as jnp
from jax import lax
from jax.experimental import pallas as pl
from jax.experimental.pallas import tpu as pltpu


def _n_tile(n):
    """Position-tile size: a lane-friendly multiple of 128 when it divides N,
    otherwise the full extent (always a legal block dim)."""
    for t in (512, 256, 128):
        if n % t == 0:
            return t
    return n


# --------------------------------------------------------------------------
# Kernel 1: fused Q/K/V 1x1-conv projection + first-step LIF spike.
#   x*_ref : (C, tn) conv-layout input tile for one batch
#   w*_ref : (C, C)  conv weight (out, in)
#   *_spk  : (C, tn) heaviside spikes (bf16; exactly 0/1)
# No bias input (projections are bias-free) and no membrane output (discarded
# by the module) -> minimal HBM traffic.
# --------------------------------------------------------------------------
def _qkv_proj_spike_kernel(xq_ref, xk_ref, xv_ref, wq_ref, wk_ref, wv_ref,
                           qs_ref, ks_ref, vs_ref, *, threshold):
    def proj_spike(w_ref, x_ref, o_ref):
        y = jnp.dot(w_ref[...], x_ref[...], preferred_element_type=jnp.float32)
        o_ref[...] = (y > threshold).astype(o_ref.dtype)

    proj_spike(wq_ref, xq_ref, qs_ref)
    proj_spike(wk_ref, xk_ref, ks_ref)
    proj_spike(wv_ref, xv_ref, vs_ref)


def qkv_proj_spike(xq, xk, xv, wq, wk, wv, *, threshold,
                   spike_dtype=jnp.bfloat16):
    B, C, N = xq.shape
    tn = _n_tile(N)
    grid = (B, N // tn)

    x_spec = pl.BlockSpec((pl.Squeezed(), C, tn), lambda b, j: (b, 0, j))
    w_spec = pl.BlockSpec((C, C), lambda b, j: (0, 0))          # weight resident
    o_spec = pl.BlockSpec((pl.Squeezed(), C, tn), lambda b, j: (b, 0, j))

    kern = functools.partial(_qkv_proj_spike_kernel, threshold=threshold)
    out_sds = jax.ShapeDtypeStruct((B, C, N), spike_dtype)
    return pl.pallas_call(
        kern,
        out_shape=(out_sds, out_sds, out_sds),
        grid=grid,
        in_specs=[x_spec, x_spec, x_spec, w_spec, w_spec, w_spec],
        out_specs=(o_spec, o_spec, o_spec),
        compiler_params=pltpu.CompilerParams(
            dimension_semantics=("parallel", "parallel")),
    )(xq, xk, xv, wq, wk, wv)


# --------------------------------------------------------------------------
# Kernel 2: spiking attention, one grid step per batch, all heads in-kernel.
#   q/k/v_ref : (N, C) token-layout spike tiles (bf16)
#   o_ref     : (N, C) lane-dense f32 output slab (heads packed along columns)
# Per head h:  out_h = Q_h @ (K_h^T @ V_h) * scale, with the N-axis contraction
# expressed directly via dot_general (no .T relayout before the MXU).
# --------------------------------------------------------------------------
def _attention_kernel(q_ref, k_ref, v_ref, o_ref, *, num_heads, head_dim, scale):
    q = q_ref[...]
    k = k_ref[...]
    v = v_ref[...]
    for h in range(num_heads):                   # static unroll; independent MXU work
        lo = h * head_dim
        hi = lo + head_dim
        qh = q[:, lo:hi]
        kh = k[:, lo:hi]
        vh = v[:, lo:hi]
        # K_h^T @ V_h : contract the N axis of both operands directly.
        ktv = lax.dot_general(kh, vh, (((0,), (0,)), ((), ())),
                              preferred_element_type=jnp.float32)   # (Dh, Dh)
        oh = jnp.dot(qh, ktv, preferred_element_type=jnp.float32)   # (N, Dh)
        o_ref[:, lo:hi] = (oh * scale).astype(o_ref.dtype)


def spiking_attention(q_tok, k_tok, v_tok, *, num_heads, scale):
    B, N, C = q_tok.shape
    head_dim = C // num_heads
    spec = pl.BlockSpec((pl.Squeezed(), N, C), lambda b: (b, 0, 0))
    kern = functools.partial(_attention_kernel, num_heads=num_heads,
                             head_dim=head_dim, scale=scale)
    return pl.pallas_call(
        kern,
        out_shape=jax.ShapeDtypeStruct((B, N, C), jnp.float32),
        grid=(B,),
        in_specs=[spec, spec, spec],
        out_specs=spec,
        compiler_params=pltpu.CompilerParams(
            dimension_semantics=("parallel",)),
    )(q_tok, k_tok, v_tok)


# --------------------------------------------------------------------------
# Kernel 3: W_o 1x1-conv (+bias) + o-LIF (threshold 0.5).
# Both spike and membrane are returned by the module, so both are written.
# --------------------------------------------------------------------------
def _out_proj_lif_kernel(x_ref, w_ref, b_ref, spk_ref, mem_ref, *, threshold):
    y = jnp.dot(w_ref[...], x_ref[...], preferred_element_type=jnp.float32)
    y = y + b_ref[...]                           # (C, tn) + (C, 1) broadcast
    mem_ref[...] = y
    spk_ref[...] = (y > threshold).astype(spk_ref.dtype)


def out_proj_lif(x, w, b, *, threshold):
    B, C, N = x.shape
    tn = _n_tile(N)
    grid = (B, N // tn)

    x_spec = pl.BlockSpec((pl.Squeezed(), C, tn), lambda bb, j: (bb, 0, j))
    w_spec = pl.BlockSpec((C, C), lambda bb, j: (0, 0))
    b_spec = pl.BlockSpec((C, 1), lambda bb, j: (0, 0))
    o_spec = pl.BlockSpec((pl.Squeezed(), C, tn), lambda bb, j: (bb, 0, j))

    kern = functools.partial(_out_proj_lif_kernel, threshold=threshold)
    out_sds = jax.ShapeDtypeStruct((B, C, N), jnp.float32)
    return pl.pallas_call(
        kern,
        out_shape=(out_sds, out_sds),
        grid=grid,
        in_specs=[x_spec, w_spec, b_spec],
        out_specs=(o_spec, o_spec),
        compiler_params=pltpu.CompilerParams(
            dimension_semantics=("parallel", "parallel")),
    )(x, w, b.reshape(C, 1))


# --------------------------------------------------------------------------
# SSA forward: 3 kernel launches, zero transposes, bitcast-only glue.
# --------------------------------------------------------------------------
def ssa_forward(Qin, Kin, Vin, params, *, num_heads):
    B, C, N = Qin.shape

    # Q/K/V projections + LIF spikes (threshold 1.0, bias-free), conv layout.
    q_spk, k_spk, v_spk = qkv_proj_spike(
        Qin, Kin, Vin, params["Wq"], params["Wk"], params["Wv"], threshold=1.0)

    # torch: X.view(B, -1, H, Dh).contiguous().transpose(1, 2) on (B, C, N).
    # Heads are contiguous Dh-column slices of the row-major (B, N, C) view,
    # so this is a free bitcast reshape (no data movement).
    q_tok = q_spk.reshape(B, N, C)
    k_tok = k_spk.reshape(B, N, C)
    v_tok = v_spk.reshape(B, N, C)

    attn_tok = spiking_attention(q_tok, k_tok, v_tok,
                                 num_heads=num_heads, scale=0.125)  # (B, N, C)

    # torch: output.transpose(1, 2).contiguous().view(B, d_model, -1)
    # = the inverse reinterpretation -> another free bitcast reshape.
    merged = attn_tok.reshape(B, C, N)

    # output projection (with bias) + o-LIF (threshold 0.5): spike + membrane.
    return out_proj_lif(merged, params["Wo"], params["bo"], threshold=0.5)


# --------------------------------------------------------------------------
# Pure-JAX reference mirroring the PyTorch forward, for verification.
# --------------------------------------------------------------------------
def ssa_reference(Qin, Kin, Vin, params, num_heads):
    B, C, N = Qin.shape
    H = num_heads
    Dh = C // H

    def conv1d(x, W, b=None):
        y = jnp.einsum("oi,bin->bon", W, x)
        if b is not None:
            y = y + b[None, :, None]
        return y

    def lif(x, thr):
        return (x > thr).astype(jnp.float32), x

    q, _ = lif(conv1d(Qin, params["Wq"]), 1.0)
    k, _ = lif(conv1d(Kin, params["Wk"]), 1.0)
    v, _ = lif(conv1d(Vin, params["Wv"]), 1.0)

    def split_heads(x):
        return jnp.transpose(x.reshape(B, N, H, Dh), (0, 2, 1, 3))

    Qh, Kh, Vh = split_heads(q), split_heads(k), split_heads(v)
    ktv = jnp.einsum("bhnd,bhne->bhde", Kh, Vh)
    out = jnp.einsum("bhnd,bhde->bhne", Qh, ktv) * 0.125
    merged = jnp.transpose(out, (0, 2, 1, 3)).reshape(B, C, N)
    o = conv1d(merged, params["Wo"], params["bo"])
    return lif(o, 0.5)


if __name__ == "__main__":
    B, d_model, num_heads, N = 2, 32, 4, 8

    key = jax.random.PRNGKey(0)
    ks = jax.random.split(key, 8)
    Qin = jax.random.normal(ks[0], (B, d_model, N), jnp.float32)
    Kin = jax.random.normal(ks[1], (B, d_model, N), jnp.float32)
    Vin = jax.random.normal(ks[2], (B, d_model, N), jnp.float32)

    w_scale = 0.3
    params = {
        "Wq": w_scale * jax.random.normal(ks[3], (d_model, d_model), jnp.float32),
        "Wk": w_scale * jax.random.normal(ks[4], (d_model, d_model), jnp.float32),
        "Wv": w_scale * jax.random.normal(ks[5], (d_model, d_model), jnp.float32),
        "Wo": w_scale * jax.random.normal(ks[6], (d_model, d_model), jnp.float32),
        "bo": 0.1 * jax.random.normal(ks[7], (d_model,), jnp.float32),
    }

    fwd = jax.jit(functools.partial(ssa_forward, num_heads=num_heads))
    spk, mem = fwd(Qin, Kin, Vin, params)
    jax.block_until_ready((spk, mem))

    ref_spk, ref_mem = ssa_reference(Qin, Kin, Vin, params, num_heads)
    assert spk.shape == (B, d_model, N) and mem.shape == (B, d_model, N)
    assert jnp.allclose(mem, ref_mem, atol=1e-4, rtol=1e-4), "membrane mismatch"
    # Spike bits must match except (possibly) where the membrane lands within
    # float rounding of the threshold (MXU vs XLA f32 matmul rounding).
    near_thr = jnp.abs(ref_mem - 0.5) < 1e-3
    assert bool(jnp.all((spk == ref_spk) | near_thr)), "spike output mismatch"

    print("KERNEL_OK")
</pallas_src>

<mosaic_0001>
module attributes {stable_mosaic.version = 11 : i64} {
  func.func @_attention_kernel(%arg0: i32, %arg1: memref<1x8x32xbf16, #tpu.memory_space<vmem>>, %arg2: memref<1x8x32xbf16, #tpu.memory_space<vmem>>, %arg3: memref<1x8x32xbf16, #tpu.memory_space<vmem>>, %arg4: memref<1x8x32xf32, #tpu.memory_space<vmem>>) attributes {dimension_semantics = [#tpu.dimension_semantics<parallel>], iteration_bounds = array<i64: 2>, scalar_prefetch = 0 : i64, scratch_operands = 0 : i64, tpu.core_type = #tpu.core_type<tc>, window_params = [{transform_indices = @transform_0, window_bounds = array<i64: 1, 8, 32>}, {transform_indices = @transform_1, window_bounds = array<i64: 1, 8, 32>}, {transform_indices = @transform_2, window_bounds = array<i64: 1, 8, 32>}, {transform_indices = @transform_3, window_bounds = array<i64: 1, 8, 32>}]} {
    %c0 = arith.constant 0 : index
    %c0_0 = arith.constant 0 : index
    %c0_1 = arith.constant 0 : index
    %0 = vector.load %arg1[%c0, %c0_0, %c0_1] : memref<1x8x32xbf16, #tpu.memory_space<vmem>>, vector<1x8x32xbf16>
    %1 = vector.shape_cast %0 : vector<1x8x32xbf16> to vector<8x32xbf16>
    %c0_2 = arith.constant 0 : index
    %c0_3 = arith.constant 0 : index
    %c0_4 = arith.constant 0 : index
    %2 = vector.load %arg2[%c0_2, %c0_3, %c0_4] : memref<1x8x32xbf16, #tpu.memory_space<vmem>>, vector<1x8x32xbf16>
    %3 = vector.shape_cast %2 : vector<1x8x32xbf16> to vector<8x32xbf16>
    %c0_5 = arith.constant 0 : index
    %c0_6 = arith.constant 0 : index
    %c0_7 = arith.constant 0 : index
    %4 = vector.load %arg3[%c0_5, %c0_6, %c0_7] : memref<1x8x32xbf16, #tpu.memory_space<vmem>>, vector<1x8x32xbf16>
    %5 = vector.shape_cast %4 : vector<1x8x32xbf16> to vector<8x32xbf16>
    %6 = vector.extract_strided_slice %1 {offsets = [0, 0], sizes = [8, 8], strides = [1, 1]} : vector<8x32xbf16> to vector<8x8xbf16>
    %7 = vector.extract_strided_slice %3 {offsets = [0, 0], sizes = [8, 8], strides = [1, 1]} : vector<8x32xbf16> to vector<8x8xbf16>
    %8 = vector.extract_strided_slice %5 {offsets = [0, 0], sizes = [8, 8], strides = [1, 1]} : vector<8x32xbf16> to vector<8x8xbf16>
    %cst = arith.constant dense<0.000000e+00> : vector<8x8xf32>
    %9 = tpu.matmul %7, %8, %cst {dimension_numbers = #tpu.dot_dimension_numbers<[0], [0], [1], [1], [0, 1, 1, 1], [], []>} : vector<8x8xbf16>, vector<8x8xbf16>, vector<8x8xf32> -> vector<8x8xf32>
    %cst_8 = arith.constant dense<0.000000e+00> : vector<8x8xf32>
    %10 = tpu.matmul %6, %9, %cst_8 {dimension_numbers = #tpu.dot_dimension_numbers<[1], [0], [0], [1], [0, 0, 1, 1], [], []>} : vector<8x8xbf16>, vector<8x8xf32>, vector<8x8xf32> -> vector<8x8xf32>
    %cst_9 = arith.constant 1.250000e-01 : f32
    %11 = vector.broadcast %cst_9 : f32 to vector<8x8xf32>
    %12 = arith.mulf %10, %11 : vector<8x8xf32>
    %c0_10 = arith.constant 0 : index
    %c0_11 = arith.constant 0 : index
    %c0_12 = arith.constant 0 : index
    %13 = vector.load %arg4[%c0_10, %c0_11, %c0_12] : memref<1x8x32xf32, #tpu.memory_space<vmem>>, vector<1x8x8xf32>
    %14 = vector.shape_cast %13 : vector<1x8x8xf32> to vector<8x8xf32>
    %15 = vector.shape_cast %12 : vector<8x8xf32> to vector<1x8x8xf32>
    tpu.vector_store %arg4[%c0_10, %c0_11, %c0_12], %15 {strides = array<i32>} : memref<1x8x32xf32, #tpu.memory_space<vmem>>, vector<1x8x8xf32>,
    %16 = vector.extract_strided_slice %1 {offsets = [0, 8], sizes = [8, 8], strides = [1, 1]} : vector<8x32xbf16> to vector<8x8xbf16>
    %17 = vector.extract_strided_slice %3 {offsets = [0, 8], sizes = [8, 8], strides = [1, 1]} : vector<8x32xbf16> to vector<8x8xbf16>
    %18 = vector.extract_strided_slice %5 {offsets = [0, 8], sizes = [8, 8], strides = [1, 1]} : vector<8x32xbf16> to vector<8x8xbf16>
    %cst_13 = arith.constant dense<0.000000e+00> : vector<8x8xf32>
    %19 = tpu.matmul %17, %18, %cst_13 {dimension_numbers = #tpu.dot_dimension_numbers<[0], [0], [1], [1], [0, 1, 1, 1], [], []>} : vector<8x8xbf16>, vector<8x8xbf16>, vector<8x8xf32> -> vector<8x8xf32>
    %cst_14 = arith.constant dense<0.000000e+00> : vector<8x8xf32>
    %20 = tpu.matmul %16, %19, %cst_14 {dimension_numbers = #tpu.dot_dimension_numbers<[1], [0], [0], [1], [0, 0, 1, 1], [], []>} : vector<8x8xbf16>, vector<8x8xf32>, vector<8x8xf32> -> vector<8x8xf32>
    %cst_15 = arith.constant 1.250000e-01 : f32
    %21 = vector.broadcast %cst_15 : f32 to vector<8x8xf32>
    %22 = arith.mulf %20, %21 : vector<8x8xf32>
    %c0_16 = arith.constant 0 : index
    %c0_17 = arith.constant 0 : index
    %c8 = arith.constant 8 : index
    %23 = vector.load %arg4[%c0_16, %c0_17, %c8] : memref<1x8x32xf32, #tpu.memory_space<vmem>>, vector<1x8x8xf32>
    %24 = vector.shape_cast %23 : vector<1x8x8xf32> to vector<8x8xf32>
    %25 = vector.shape_cast %22 : vector<8x8xf32> to vector<1x8x8xf32>
    tpu.vector_store %arg4[%c0_16, %c0_17, %c8], %25 {strides = array<i32>} : memref<1x8x32xf32, #tpu.memory_space<vmem>>, vector<1x8x8xf32>,
    %26 = vector.extract_strided_slice %1 {offsets = [0, 16], sizes = [8, 8], strides = [1, 1]} : vector<8x32xbf16> to vector<8x8xbf16>
    %27 = vector.extract_strided_slice %3 {offsets = [0, 16], sizes = [8, 8], strides = [1, 1]} : vector<8x32xbf16> to vector<8x8xbf16>
    %28 = vector.extract_strided_slice %5 {offsets = [0, 16], sizes = [8, 8], strides = [1, 1]} : vector<8x32xbf16> to vector<8x8xbf16>
    %cst_18 = arith.constant dense<0.000000e+00> : vector<8x8xf32>
    %29 = tpu.matmul %27, %28, %cst_18 {dimension_numbers = #tpu.dot_dimension_numbers<[0], [0], [1], [1], [0, 1, 1, 1], [], []>} : vector<8x8xbf16>, vector<8x8xbf16>, vector<8x8xf32> -> vector<8x8xf32>
    %cst_19 = arith.constant dense<0.000000e+00> : vector<8x8xf32>
    %30 = tpu.matmul %26, %29, %cst_19 {dimension_numbers = #tpu.dot_dimension_numbers<[1], [0], [0], [1], [0, 0, 1, 1], [], []>} : vector<8x8xbf16>, vector<8x8xf32>, vector<8x8xf32> -> vector<8x8xf32>
    %cst_20 = arith.constant 1.250000e-01 : f32
    %31 = vector.broadcast %cst_20 : f32 to vector<8x8xf32>
    %32 = arith.mulf %30, %31 : vector<8x8xf32>
    %c0_21 = arith.constant 0 : index
    %c0_22 = arith.constant 0 : index
    %c16 = arith.constant 16 : index
    %33 = vector.load %arg4[%c0_21, %c0_22, %c16] : memref<1x8x32xf32, #tpu.memory_space<vmem>>, vector<1x8x8xf32>
    %34 = vector.shape_cast %33 : vector<1x8x8xf32> to vector<8x8xf32>
    %35 = vector.shape_cast %32 : vector<8x8xf32> to vector<1x8x8xf32>
    tpu.vector_store %arg4[%c0_21, %c0_22, %c16], %35 {strides = array<i32>} : memref<1x8x32xf32, #tpu.memory_space<vmem>>, vector<1x8x8xf32>,
    %36 = vector.extract_strided_slice %1 {offsets = [0, 24], sizes = [8, 8], strides = [1, 1]} : vector<8x32xbf16> to vector<8x8xbf16>
    %37 = vector.extract_strided_slice %3 {offsets = [0, 24], sizes = [8, 8], strides = [1, 1]} : vector<8x32xbf16> to vector<8x8xbf16>
    %38 = vector.extract_strided_slice %5 {offsets = [0, 24], sizes = [8, 8], strides = [1, 1]} : vector<8x32xbf16> to vector<8x8xbf16>
    %cst_23 = arith.constant dense<0.000000e+00> : vector<8x8xf32>
    %39 = tpu.matmul %37, %38, %cst_23 {dimension_numbers = #tpu.dot_dimension_numbers<[0], [0], [1], [1], [0, 1, 1, 1], [], []>} : vector<8x8xbf16>, vector<8x8xbf16>, vector<8x8xf32> -> vector<8x8xf32>
    %cst_24 = arith.constant dense<0.000000e+00> : vector<8x8xf32>
    %40 = tpu.matmul %36, %39, %cst_24 {dimension_numbers = #tpu.dot_dimension_numbers<[1], [0], [0], [1], [0, 0, 1, 1], [], []>} : vector<8x8xbf16>, vector<8x8xf32>, vector<8x8xf32> -> vector<8x8xf32>
    %cst_25 = arith.constant 1.250000e-01 : f32
    %41 = vector.broadcast %cst_25 : f32 to vector<8x8xf32>
    %42 = arith.mulf %40, %41 : vector<8x8xf32>
    %c0_26 = arith.constant 0 : index
    %c0_27 = arith.constant 0 : index
    %c24 = arith.constant 24 : index
    %43 = vector.load %arg4[%c0_26, %c0_27, %c24] : memref<1x8x32xf32, #tpu.memory_space<vmem>>, vector<1x8x8xf32>
    %44 = vector.shape_cast %43 : vector<1x8x8xf32> to vector<8x8xf32>
    %45 = vector.shape_cast %42 : vector<8x8xf32> to vector<1x8x8xf32>
    tpu.vector_store %arg4[%c0_26, %c0_27, %c24], %45 {strides = array<i32>} : memref<1x8x32xf32, #tpu.memory_space<vmem>>, vector<1x8x8xf32>,
    return
  }
  func.func @transform_0(%arg0: i32) -> (i32, i32, i32) {
    %c0_i32 = arith.constant 0 : i32
    %c0_i32_0 = arith.constant 0 : i32
    %c0_i32_1 = arith.constant 0 : i32
    return %arg0, %c0_i32, %c0_i32_0 : i32, i32, i32
  }
  func.func @transform_1(%arg0: i32) -> (i32, i32, i32) {
    %c0_i32 = arith.constant 0 : i32
    %c0_i32_0 = arith.constant 0 : i32
    %c0_i32_1 = arith.constant 0 : i32
    return %arg0, %c0_i32, %c0_i32_0 : i32, i32, i32
  }
  func.func @transform_2(%arg0: i32) -> (i32, i32, i32) {
    %c0_i32 = arith.constant 0 : i32
    %c0_i32_0 = arith.constant 0 : i32
    %c0_i32_1 = arith.constant 0 : i32
    return %arg0, %c0_i32, %c0_i32_0 : i32, i32, i32
  }
  func.func @transform_3(%arg0: i32) -> (i32, i32, i32) {
    %c0_i32 = arith.constant 0 : i32
    %c0_i32_0 = arith.constant 0 : i32
    %c0_i32_1 = arith.constant 0 : i32
    return %arg0, %c0_i32, %c0_i32_0 : i32, i32, i32
  }
}

module attributes {stable_mosaic.version = 11 : i64} {
  func.func @_qkv_proj_spike_kernel(%arg0: i32, %arg1: i32, %arg2: memref<1x32x8xf32, #tpu.memory_space<vmem>>, %arg3: memref<1x32x8xf32, #tpu.memory_space<vmem>>, %arg4: memref<1x32x8xf32, #tpu.memory_space<vmem>>, %arg5: memref<32x32xf32, #tpu.memory_space<vmem>>, %arg6: memref<32x32xf32, #tpu.memory_space<vmem>>, %arg7: memref<32x32xf32, #tpu.memory_space<vmem>>, %arg8: memref<1x32x8xbf16, #tpu.memory_space<vmem>>, %arg9: memref<1x32x8xbf16, #tpu.memory_space<vmem>>, %arg10: memref<1x32x8xbf16, #tpu.memory_space<vmem>>) attributes {dimension_semantics = [#tpu.dimension_semantics<parallel>, #tpu.dimension_semantics<parallel>], iteration_bounds = array<i64: 2, 1>, scalar_prefetch = 0 : i64, scratch_operands = 0 : i64, tpu.core_type = #tpu.core_type<tc>, window_params = [{transform_indices = @transform_0, window_bounds = array<i64: 1, 32, 8>}, {transform_indices = @transform_1, window_bounds = array<i64: 1, 32, 8>}, {transform_indices = @transform_2, window_bounds = array<i64: 1, 32, 8>}, {pipeline_mode = #tpu.pipeline_mode<synchronous>, transform_indices = @transform_3, window_bounds = array<i64: 32, 32>}, {pipeline_mode = #tpu.pipeline_mode<synchronous>, transform_indices = @transform_4, window_bounds = array<i64: 32, 32>}, {pipeline_mode = #tpu.pipeline_mode<synchronous>, transform_indices = @transform_5, window_bounds = array<i64: 32, 32>}, {transform_indices = @transform_6, window_bounds = array<i64: 1, 32, 8>}, {transform_indices = @transform_7, window_bounds = array<i64: 1, 32, 8>}, {transform_indices = @transform_8, window_bounds = array<i64: 1, 32, 8>}]} {
    %c0 = arith.constant 0 : index
    %c0_0 = arith.constant 0 : index
    %0 = vector.load %arg5[%c0, %c0_0] : memref<32x32xf32, #tpu.memory_space<vmem>>, vector<32x32xf32>
    %c0_1 = arith.constant 0 : index
    %c0_2 = arith.constant 0 : index
    %c0_3 = arith.constant 0 : index
    %1 = vector.load %arg2[%c0_1, %c0_2, %c0_3] : memref<1x32x8xf32, #tpu.memory_space<vmem>>, vector<1x32x8xf32>
    %2 = vector.shape_cast %1 : vector<1x32x8xf32> to vector<32x8xf32>
    %cst = arith.constant dense<0.000000e+00> : vector<32x8xf32>
    %3 = tpu.matmul %0, %2, %cst {dimension_numbers = #tpu.dot_dimension_numbers<[1], [0], [0], [1], [0, 0, 1, 1], [], []>} : vector<32x32xf32>, vector<32x8xf32>, vector<32x8xf32> -> vector<32x8xf32>
    %cst_4 = arith.constant 1.000000e+00 : f32
    %4 = vector.broadcast %cst_4 : f32 to vector<32x8xf32>
    %5 = arith.cmpf ogt, %3, %4 : vector<32x8xf32>
    %6 = arith.extui %5 : vector<32x8xi1> to vector<32x8xi32>
    %7 = arith.sitofp %6 : vector<32x8xi32> to vector<32x8xf32>
    %8 = arith.truncf %7 : vector<32x8xf32> to vector<32x8xbf16>
    %c0_5 = arith.constant 0 : index
    %c0_6 = arith.constant 0 : index
    %c0_7 = arith.constant 0 : index
    %9 = vector.load %arg8[%c0_5, %c0_6, %c0_7] : memref<1x32x8xbf16, #tpu.memory_space<vmem>>, vector<1x32x8xbf16>
    %10 = vector.shape_cast %9 : vector<1x32x8xbf16> to vector<32x8xbf16>
    %11 = vector.shape_cast %8 : vector<32x8xbf16> to vector<1x32x8xbf16>
    tpu.vector_store %arg8[%c0_5, %c0_6, %c0_7], %11 {strides = array<i32>} : memref<1x32x8xbf16, #tpu.memory_space<vmem>>, vector<1x32x8xbf16>,
    %c0_8 = arith.constant 0 : index
    %c0_9 = arith.constant 0 : index
    %12 = vector.load %arg6[%c0_8, %c0_9] : memref<32x32xf32, #tpu.memory_space<vmem>>, vector<32x32xf32>
    %c0_10 = arith.constant 0 : index
    %c0_11 = arith.constant 0 : index
    %c0_12 = arith.constant 0 : index
    %13 = vector.load %arg3[%c0_10, %c0_11, %c0_12] : memref<1x32x8xf32, #tpu.memory_space<vmem>>, vector<1x32x8xf32>
    %14 = vector.shape_cast %13 : vector<1x32x8xf32> to vector<32x8xf32>
    %cst_13 = arith.constant dense<0.000000e+00> : vector<32x8xf32>
    %15 = tpu.matmul %12, %14, %cst_13 {dimension_numbers = #tpu.dot_dimension_numbers<[1], [0], [0], [1], [0, 0, 1, 1], [], []>} : vector<32x32xf32>, vector<32x8xf32>, vector<32x8xf32> -> vector<32x8xf32>
    %cst_14 = arith.constant 1.000000e+00 : f32
    %16 = vector.broadcast %cst_14 : f32 to vector<32x8xf32>
    %17 = arith.cmpf ogt, %15, %16 : vector<32x8xf32>
    %18 = arith.extui %17 : vector<32x8xi1> to vector<32x8xi32>
    %19 = arith.sitofp %18 : vector<32x8xi32> to vector<32x8xf32>
    %20 = arith.truncf %19 : vector<32x8xf32> to vector<32x8xbf16>
    %c0_15 = arith.constant 0 : index
    %c0_16 = arith.constant 0 : index
    %c0_17 = arith.constant 0 : index
    %21 = vector.load %arg9[%c0_15, %c0_16, %c0_17] : memref<1x32x8xbf16, #tpu.memory_space<vmem>>, vector<1x32x8xbf16>
    %22 = vector.shape_cast %21 : vector<1x32x8xbf16> to vector<32x8xbf16>
    %23 = vector.shape_cast %20 : vector<32x8xbf16> to vector<1x32x8xbf16>
    tpu.vector_store %arg9[%c0_15, %c0_16, %c0_17], %23 {strides = array<i32>} : memref<1x32x8xbf16, #tpu.memory_space<vmem>>, vector<1x32x8xbf16>,
    %c0_18 = arith.constant 0 : index
    %c0_19 = arith.constant 0 : index
    %24 = vector.load %arg7[%c0_18, %c0_19] : memref<32x32xf32, #tpu.memory_space<vmem>>, vector<32x32xf32>
    %c0_20 = arith.constant 0 : index
    %c0_21 = arith.constant 0 : index
    %c0_22 = arith.constant 0 : index
    %25 = vector.load %arg4[%c0_20, %c0_21, %c0_22] : memref<1x32x8xf32, #tpu.memory_space<vmem>>, vector<1x32x8xf32>
    %26 = vector.shape_cast %25 : vector<1x32x8xf32> to vector<32x8xf32>
    %cst_23 = arith.constant dense<0.000000e+00> : vector<32x8xf32>
    %27 = tpu.matmul %24, %26, %cst_23 {dimension_numbers = #tpu.dot_dimension_numbers<[1], [0], [0], [1], [0, 0, 1, 1], [], []>} : vector<32x32xf32>, vector<32x8xf32>, vector<32x8xf32> -> vector<32x8xf32>
    %cst_24 = arith.constant 1.000000e+00 : f32
    %28 = vector.broadcast %cst_24 : f32 to vector<32x8xf32>
    %29 = arith.cmpf ogt, %27, %28 : vector<32x8xf32>
    %30 = arith.extui %29 : vector<32x8xi1> to vector<32x8xi32>
    %31 = arith.sitofp %30 : vector<32x8xi32> to vector<32x8xf32>
    %32 = arith.truncf %31 : vector<32x8xf32> to vector<32x8xbf16>
    %c0_25 = arith.constant 0 : index
    %c0_26 = arith.constant 0 : index
    %c0_27 = arith.constant 0 : index
    %33 = vector.load %arg10[%c0_25, %c0_26, %c0_27] : memref<1x32x8xbf16, #tpu.memory_space<vmem>>, vector<1x32x8xbf16>
    %34 = vector.shape_cast %33 : vector<1x32x8xbf16> to vector<32x8xbf16>
    %35 = vector.shape_cast %32 : vector<32x8xbf16> to vector<1x32x8xbf16>
    tpu.vector_store %arg10[%c0_25, %c0_26, %c0_27], %35 {strides = array<i32>} : memref<1x32x8xbf16, #tpu.memory_space<vmem>>, vector<1x32x8xbf16>,
    return
  }
  func.func @transform_0(%arg0: i32, %arg1: i32) -> (i32, i32, i32) {
    %c0_i32 = arith.constant 0 : i32
    %c0_i32_0 = arith.constant 0 : i32
    return %arg0, %c0_i32, %arg1 : i32, i32, i32
  }
  func.func @transform_1(%arg0: i32, %arg1: i32) -> (i32, i32, i32) {
    %c0_i32 = arith.constant 0 : i32
    %c0_i32_0 = arith.constant 0 : i32
    return %arg0, %c0_i32, %arg1 : i32, i32, i32
  }
  func.func @transform_2(%arg0: i32, %arg1: i32) -> (i32, i32, i32) {
    %c0_i32 = arith.constant 0 : i32
    %c0_i32_0 = arith.constant 0 : i32
    return %arg0, %c0_i32, %arg1 : i32, i32, i32
  }
  func.func @transform_3(%arg0: i32, %arg1: i32) -> (i32, i32) {
    %c0_i32 = arith.constant 0 : i32
    %c0_i32_0 = arith.constant 0 : i32
    %c0_i32_1 = arith.constant 0 : i32
    return %c0_i32, %c0_i32_0 : i32, i32
  }
  func.func @transform_4(%arg0: i32, %arg1: i32) -> (i32, i32) {
    %c0_i32 = arith.constant 0 : i32
    %c0_i32_0 = arith.constant 0 : i32
    %c0_i32_1 = arith.constant 0 : i32
    return %c0_i32, %c0_i32_0 : i32, i32
  }
  func.func @transform_5(%arg0: i32, %arg1: i32) -> (i32, i32) {
    %c0_i32 = arith.constant 0 : i32
    %c0_i32_0 = arith.constant 0 : i32
    %c0_i32_1 = arith.constant 0 : i32
    return %c0_i32, %c0_i32_0 : i32, i32
  }
  func.func @transform_6(%arg0: i32, %arg1: i32) -> (i32, i32, i32) {
    %c0_i32 = arith.constant 0 : i32
    %c0_i32_0 = arith.constant 0 : i32
    return %arg0, %c0_i32, %arg1 : i32, i32, i32
  }
  func.func @transform_7(%arg0: i32, %arg1: i32) -> (i32, i32, i32) {
    %c0_i32 = arith.constant 0 : i32
    %c0_i32_0 = arith.constant 0 : i32
    return %arg0, %c0_i32, %arg1 : i32, i32, i32
  }
  func.func @transform_8(%arg0: i32, %arg1: i32) -> (i32, i32, i32) {
    %c0_i32 = arith.constant 0 : i32
    %c0_i32_0 = arith.constant 0 : i32
    return %arg0, %c0_i32, %arg1 : i32, i32, i32
  }
}

module attributes {stable_mosaic.version = 11 : i64} {
  func.func @_out_proj_lif_kernel(%arg0: i32, %arg1: i32, %arg2: memref<1x32x8xf32, #tpu.memory_space<vmem>>, %arg3: memref<32x32xf32, #tpu.memory_space<vmem>>, %arg4: memref<32x1xf32, #tpu.memory_space<vmem>>, %arg5: memref<1x32x8xf32, #tpu.memory_space<vmem>>, %arg6: memref<1x32x8xf32, #tpu.memory_space<vmem>>) attributes {dimension_semantics = [#tpu.dimension_semantics<parallel>, #tpu.dimension_semantics<parallel>], iteration_bounds = array<i64: 2, 1>, scalar_prefetch = 0 : i64, scratch_operands = 0 : i64, tpu.core_type = #tpu.core_type<tc>, window_params = [{transform_indices = @transform_0, window_bounds = array<i64: 1, 32, 8>}, {pipeline_mode = #tpu.pipeline_mode<synchronous>, transform_indices = @transform_1, window_bounds = array<i64: 32, 32>}, {pipeline_mode = #tpu.pipeline_mode<synchronous>, transform_indices = @transform_2, window_bounds = array<i64: 32, 1>}, {transform_indices = @transform_3, window_bounds = array<i64: 1, 32, 8>}, {transform_indices = @transform_4, window_bounds = array<i64: 1, 32, 8>}]} {
    %c0 = arith.constant 0 : index
    %c0_0 = arith.constant 0 : index
    %0 = vector.load %arg3[%c0, %c0_0] : memref<32x32xf32, #tpu.memory_space<vmem>>, vector<32x32xf32>
    %c0_1 = arith.constant 0 : index
    %c0_2 = arith.constant 0 : index
    %c0_3 = arith.constant 0 : index
    %1 = vector.load %arg2[%c0_1, %c0_2, %c0_3] : memref<1x32x8xf32, #tpu.memory_space<vmem>>, vector<1x32x8xf32>
    %2 = vector.shape_cast %1 : vector<1x32x8xf32> to vector<32x8xf32>
    %cst = arith.constant dense<0.000000e+00> : vector<32x8xf32>
    %3 = tpu.matmul %0, %2, %cst {dimension_numbers = #tpu.dot_dimension_numbers<[1], [0], [0], [1], [0, 0, 1, 1], [], []>} : vector<32x32xf32>, vector<32x8xf32>, vector<32x8xf32> -> vector<32x8xf32>
    %c0_4 = arith.constant 0 : index
    %c0_5 = arith.constant 0 : index
    %4 = vector.load %arg4[%c0_4, %c0_5] : memref<32x1xf32, #tpu.memory_space<vmem>>, vector<32x1xf32>
    %5 = vector.broadcast %4 : vector<32x1xf32> to vector<32x8xf32>
    %6 = arith.addf %3, %5 : vector<32x8xf32>
    %c0_6 = arith.constant 0 : index
    %c0_7 = arith.constant 0 : index
    %c0_8 = arith.constant 0 : index
    %7 = vector.load %arg6[%c0_6, %c0_7, %c0_8] : memref<1x32x8xf32, #tpu.memory_space<vmem>>, vector<1x32x8xf32>
    %8 = vector.shape_cast %7 : vector<1x32x8xf32> to vector<32x8xf32>
    %9 = vector.shape_cast %6 : vector<32x8xf32> to vector<1x32x8xf32>
    tpu.vector_store %arg6[%c0_6, %c0_7, %c0_8], %9 {strides = array<i32>} : memref<1x32x8xf32, #tpu.memory_space<vmem>>, vector<1x32x8xf32>,
    %cst_9 = arith.constant 5.000000e-01 : f32
    %10 = vector.broadcast %cst_9 : f32 to vector<32x8xf32>
    %11 = arith.cmpf ogt, %6, %10 : vector<32x8xf32>
    %12 = arith.extui %11 : vector<32x8xi1> to vector<32x8xi32>
    %13 = arith.sitofp %12 : vector<32x8xi32> to vector<32x8xf32>
    %c0_10 = arith.constant 0 : index
    %c0_11 = arith.constant 0 : index
    %c0_12 = arith.constant 0 : index
    %14 = vector.load %arg5[%c0_10, %c0_11, %c0_12] : memref<1x32x8xf32, #tpu.memory_space<vmem>>, vector<1x32x8xf32>
    %15 = vector.shape_cast %14 : vector<1x32x8xf32> to vector<32x8xf32>
    %16 = vector.shape_cast %13 : vector<32x8xf32> to vector<1x32x8xf32>
    tpu.vector_store %arg5[%c0_10, %c0_11, %c0_12], %16 {strides = array<i32>} : memref<1x32x8xf32, #tpu.memory_space<vmem>>, vector<1x32x8xf32>,
    return
  }
  func.func @transform_0(%arg0: i32, %arg1: i32) -> (i32, i32, i32) {
    %c0_i32 = arith.constant 0 : i32
    %c0_i32_0 = arith.constant 0 : i32
    return %arg0, %c0_i32, %arg1 : i32, i32, i32
  }
  func.func @transform_1(%arg0: i32, %arg1: i32) -> (i32, i32) {
    %c0_i32 = arith.constant 0 : i32
    %c0_i32_0 = arith.constant 0 : i32
    %c0_i32_1 = arith.constant 0 : i32
    return %c0_i32, %c0_i32_0 : i32, i32
  }
  func.func @transform_2(%arg0: i32, %arg1: i32) -> (i32, i32) {
    %c0_i32 = arith.constant 0 : i32
    %c0_i32_0 = arith.constant 0 : i32
    %c0_i32_1 = arith.constant 0 : i32
    return %c0_i32, %c0_i32_0 : i32, i32
  }
  func.func @transform_3(%arg0: i32, %arg1: i32) -> (i32, i32, i32) {
    %c0_i32 = arith.constant 0 : i32
    %c0_i32_0 = arith.constant 0 : i32
    return %arg0, %c0_i32, %arg1 : i32, i32, i32
  }
  func.func @transform_4(%arg0: i32, %arg1: i32) -> (i32, i32, i32) {
    %c0_i32 = arith.constant 0 : i32
    %c0_i32_0 = arith.constant 0 : i32
    return %arg0, %c0_i32, %arg1 : i32, i32, i32
  }
}

</mosaic_0001>

<llo_original>
// kernel: ssa_forward.4
$region0: #{ssa_forward.4}
  #allocation0 [shape = 'u32[]', space=smem, size = 0x4, offset = 0x4, fixed_abs, tag = 'smem constant byte address 0x4 - core index']
  #allocation1 [shape = 'u32[144,128]{1,0:T(1,128)}', space=vmem, size = 0x12000, scoped, tag = 'internal scratch']
  %s0 = inlined_call_operand.vmem [shape: bf16[2,8,32], index: 0, kind: input, shape index: {}]
  %s1 = inlined_call_operand.vmem [shape: bf16[2,8,32], index: 1, kind: input, shape index: {}]
  %s2 = inlined_call_operand.vmem [shape: bf16[2,8,32], index: 2, kind: input, shape index: {}]
  %s3 = inlined_call_operand.vmem [shape: f32[2,8,32], index: 3, kind: output, shape index: {}]
  %s4 = sld [smem:[#allocation0]]
  $region45: #{ssa_forward.4} parent=0
    _
  %s6 = ssub.s32 1, %s4
  %s7 = scalar_select 0, %s6, %s4
  loop: start=0, step=1, limit=4
  $region2: #{ssa_forward.4} parent=0 // loop_pre_header
    _
  $region3: #{ssa_forward.4} parent=0 // loop_header
    %s9 = sphi 0, %s13
    %p10 = scmp.ge.s32.totalorder %s9, 4
    %s19 = sphi 0, %s21
    %s22 = sphi 0, %s19
    %s23 = sphi 0, %s22
    %s39 = sphi 0, %s23
    %s45 = sphi 0, %s47
    %s48 = sphi 0, %s45
    %s49 = sphi 0, %s48
    %s65 = sphi 0, %s49
    %s71 = sphi 0, %s73
    %s74 = sphi 0, %s71
    %s75 = sphi 0, %s74
    %s91 = sphi 0, %s75
    %s97 = sphi 0, %s99
    %s100 = sphi 0, %s97
    %s101 = sphi 0, %s100
    %s117 = sphi 0, %s101
  $region4: #{ssa_forward.4} parent=0 // loop_header_branch
    %12 = sbr.rel (%p10) target = $region8
  $region5: #{ssa_forward.4} parent=0 // loop_body
    %s14 = ssub.s32 %s9, 1
    %s15 = ssub.s32 %s9, 2
    %s16 = sadd.s32 %s9, 1
    %s17 = ssub.s32 %s9, %s16
    %p18 = scmp.eq.s32.totalorder %s17, 0
    %s20 = sadd.s32 %s19, 1
    %s21 = scalar_select %p18, %s19, %s20
    %p24 = pneg %p18
    %p25 = scmp.eq.s32.totalorder %s9, 1
    %p26 = por %p24, %p25
    %p27 = scmp.ne.s32.totalorder %s19, %s22
    %p28 = scmp.eq.s32.totalorder %s9, 0
    %p29 = por %p27, %p28
    %p30 = scmp.ne.s32.totalorder %s19, %s22
    %p31 = scmp.eq.s32.totalorder %s14, 1
    %p32 = por %p30, %p31
    %p33 = scmp.ne.s32.totalorder %s22, %s23
    %p34 = scmp.eq.s32.totalorder %s14, 0
    %p35 = por %p33, %p34
    %p36 = scmp.ne.s32.totalorder %s22, %s23
    %p37 = scmp.eq.s32.totalorder %s15, 1
    %p38 = por %p36, %p37
    %p40 = scmp.ne.s32.totalorder %s23, %s39
    %p41 = scmp.eq.s32.totalorder %s15, 0
    %p42 = por %p40, %p41
    %s43 = ssub.s32 %s9, %s16
    %p44 = scmp.eq.s32.totalorder %s43, 0
    %s46 = sadd.s32 %s45, 1
    %s47 = scalar_select %p44, %s45, %s46
    %p50 = pneg %p44
    %p51 = scmp.eq.s32.totalorder %s9, 1
    %p52 = por %p50, %p51
    %p53 = scmp.ne.s32.totalorder %s45, %s48
    %p54 = scmp.eq.s32.totalorder %s9, 0
    %p55 = por %p53, %p54
    %p56 = scmp.ne.s32.totalorder %s45, %s48
    %p57 = scmp.eq.s32.totalorder %s14, 1
    %p58 = por %p56, %p57
    %p59 = scmp.ne.s32.totalorder %s48, %s49
    %p60 = scmp.eq.s32.totalorder %s14, 0
    %p61 = por %p59, %p60
    %p62 = scmp.ne.s32.totalorder %s48, %s49
    %p63 = scmp.eq.s32.totalorder %s15, 1
    %p64 = por %p62, %p63
    %p66 = scmp.ne.s32.totalorder %s49, %s65
    %p67 = scmp.eq.s32.totalorder %s15, 0
    %p68 = por %p66, %p67
    %s69 = ssub.s32 %s9, %s16
    %p70 = scmp.eq.s32.totalorder %s69, 0
    %s72 = sadd.s32 %s71, 1
    %s73 = scalar_select %p70, %s71, %s72
    %p76 = pneg %p70
    %p77 = scmp.eq.s32.totalorder %s9, 1
    %p78 = por %p76, %p77
    %p79 = scmp.ne.s32.totalorder %s71, %s74
    %p80 = scmp.eq.s32.totalorder %s9, 0
    %p81 = por %p79, %p80
    %p82 = scmp.ne.s32.totalorder %s71, %s74
    %p83 = scmp.eq.s32.totalorder %s14, 1
    %p84 = por %p82, %p83
    %p85 = scmp.ne.s32.totalorder %s74, %s75
    %p86 = scmp.eq.s32.totalorder %s14, 0
    %p87 = por %p85, %p86
    %p88 = scmp.ne.s32.totalorder %s74, %s75
    %p89 = scmp.eq.s32.totalorder %s15, 1
    %p90 = por %p88, %p89
    %p92 = scmp.ne.s32.totalorder %s75, %s91
    %p93 = scmp.eq.s32.totalorder %s15, 0
    %p94 = por %p92, %p93
    %s95 = ssub.s32 %s9, %s16
    %p96 = scmp.eq.s32.totalorder %s95, 0
    %s98 = sadd.s32 %s97, 1
    %s99 = scalar_select %p96, %s97, %s98
    %p102 = pneg %p96
    %p103 = scmp.eq.s32.totalorder %s9, 1
    %p104 = por %p102, %p103
    %p105 = scmp.ne.s32.totalorder %s97, %s100
    %p106 = scmp.eq.s32.totalorder %s9, 0
    %p107 = por %p105, %p106
    %p108 = scmp.ne.s32.totalorder %s97, %s100
    %p109 = scmp.eq.s32.totalorder %s14, 1
    %p110 = por %p108, %p109
    %p111 = scmp.ne.s32.totalorder %s100, %s101
    %p112 = scmp.eq.s32.totalorder %s14, 0
    %p113 = por %p111, %p112
    %p114 = scmp.ne.s32.totalorder %s100, %s101
    %p115 = scmp.eq.s32.totalorder %s15, 1
    %p116 = por %p114, %p115
    %p118 = scmp.ne.s32.totalorder %s101, %s117
    %p119 = scmp.eq.s32.totalorder %s15, 0
    %p120 = por %p118, %p119
    %p121 = scmp.le.s32.totalorder 1, %s9
    %p122 = scmp.lt.s32.totalorder %s9, 3
    %p123 = pnand %p121, %p122
    %p124 = pneg %p123
    // Predicated region
    $region9: #{ssa_forward.4} parent=5 // pred_check
      _
    $region10: #{ssa_forward.4} parent=5 // pred_check_branch
      %126 = sbr.rel (%p123) target = $region12
    $region11: #{ssa_forward.4} parent=5 // pred_region
      %s127 = ssub.s32 %s9, 1
    $region12: #{ssa_forward.4} parent=5 // pred_fallthru
      _
    %p128 = scmp.lt.s32.totalorder %s9, 2
    // Predicated region
    $region13: #{ssa_forward.4} parent=5 // pred_check
      %p129 = pneg %p128
    $region14: #{ssa_forward.4} parent=5 // pred_check_branch
      %131 = sbr.rel (%p129) target = $region16
    $region15: #{ssa_forward.4} parent=5 // pred_region
      // Predicated region
      $region17: #{ssa_forward.4} parent=15 // pred_check
        %p132 = pneg %p29
      $region18: #{ssa_forward.4} parent=15 // pred_check_branch
        %134 = sbr.rel (%p132) target = $region20
      $region19: #{ssa_forward.4} parent=15 // pred_region
        %p135 = scmp.lt.s32.totalorder %s9, 1
        %s136 = scalar_select %p135, %s9, 1
        %s137 = smul.addr %s136, 4
        %s138 = scalar_lea.vmem %s0, %s137
      $region20: #{ssa_forward.4} parent=15 // pred_fallthru
        _
      // Predicated region
      $region21: #{ssa_forward.4} parent=15 // pred_check
        %p139 = pneg %p55
      $region22: #{ssa_forward.4} parent=15 // pred_check_branch
        %141 = sbr.rel (%p139) target = $region24
      $region23: #{ssa_forward.4} parent=15 // pred_region
        %p142 = scmp.lt.s32.totalorder %s9, 1
        %s143 = scalar_select %p142, %s9, 1
        %s144 = smul.addr %s143, 4
        %s145 = scalar_lea.vmem %s1, %s144
      $region24: #{ssa_forward.4} parent=15 // pred_fallthru
        _
      // Predicated region
      $region25: #{ssa_forward.4} parent=15 // pred_check
        %p146 = pneg %p81
      $region26: #{ssa_forward.4} parent=15 // pred_check_branch
        %148 = sbr.rel (%p146) target = $region28
      $region27: #{ssa_forward.4} parent=15 // pred_region
        %p149 = scmp.lt.s32.totalorder %s9, 1
        %s150 = scalar_select %p149, %s9, 1
        %s151 = smul.addr %s150, 4
        %s152 = scalar_lea.vmem %s2, %s151
      $region28: #{ssa_forward.4} parent=15 // pred_fallthru
        _
    $region16: #{ssa_forward.4} parent=5 // pred_fallthru
      _
    %p153 = scmp.le.s32.totalorder 1, %s9
    %p154 = scmp.lt.s32.totalorder %s9, 3
    %p155 = pnand %p153, %p154
    %p156 = pneg %p155
    // Predicated region
    $region29: #{ssa_forward.4} parent=5 // pred_check
      _
    $region30: #{ssa_forward.4} parent=5 // pred_check_branch
      %158 = sbr.rel (%p155) target = $region32
    $region31: #{ssa_forward.4} parent=5 // pred_region
      %s159 = ssub.s32 %s9, 1
      %p160 = scmp.lt.s32.totalorder %s14, 1
      %s161 = scalar_select %p160, %s14, 1
      %s162 = smul.addr %s161, 4
      %s163 = scalar_lea.vmem %s0, %s162
      %p164 = pneg %p35
      %p165 = pneg %p32
      %p166 = scmp.lt.s32.totalorder %s14, 1
      %s167 = scalar_select %p166, %s14, 1
      %s168 = smul.addr %s167, 4
      %s169 = scalar_lea.vmem %s1, %s168
      %p170 = pneg %p61
      %p171 = pneg %p58
      %p172 = scmp.lt.s32.totalorder %s14, 1
      %s173 = scalar_select %p172, %s14, 1
      %s174 = smul.addr %s173, 4
      %s175 = scalar_lea.vmem %s2, %s174
      %p176 = pneg %p87
      %p177 = pneg %p84
      %p178 = pneg %p113
      %p179 = pneg %p110
      %p180 = scmp.lt.s32.totalorder %s14, 1
      %s181 = scalar_select %p180, %s14, 1
      %s182 = smul.addr %s181, 8
      %s183 = scalar_lea.vmem %s3, %s182
      %p184 = scmp.lt.s32.totalorder %s14, 1
      %s185 = scalar_select %p184, %s14, 1
      %s186 = smul.addr %s185, 4
      %s187 = scalar_lea.vmem %s0, %s186
      %p188 = scmp.lt.s32.totalorder %s14, 1
      %s189 = scalar_select %p188, %s14, 1
      %s190 = smul.addr %s189, 4
      %s191 = scalar_lea.vmem %s1, %s190
      %p192 = scmp.lt.s32.totalorder %s14, 1
      %s193 = scalar_select %p192, %s14, 1
      %s194 = smul.addr %s193, 4
      %s195 = scalar_lea.vmem %s2, %s194
      %p196 = scmp.lt.s32.totalorder %s14, 1
      %s197 = scalar_select %p196, %s14, 1
      %s198 = smul.addr %s197, 8
      %s199 = scalar_lea.vmem %s3, %s198
      %v201 = vld [vmem:[%s187] sm:$0xf]
      %v202 = vld [vmem:[%s191] sm:$0xf]
      %v203 = vld [vmem:[%s195] sm:$0xf]
      %204 = vxpose.xlu0.c.b16.start [1/8] %v202, 128
      %205 = vxpose.xlu0.c.b16.cont [2/8] 0, 128
      %206 = vxpose.xlu0.c.b16.cont [3/8] 0, 128
      %207 = vxpose.xlu0.c.b16.cont [4/8] 0, 128
      %208 = vxpose.xlu0.c.b16.cont [5/8] 0, 128
      %209 = vxpose.xlu0.c.b16.cont [6/8] 0, 128
      %210 = vxpose.xlu0.c.b16.cont [7/8] 0, 128
      %211 = vxpose.xlu0.c.b16.end [8/8] 0, 128
      %v212 = vpop.trf.xlu0
      %v213 = vpop.trf.xlu0
      %v214 = vpop.trf.xlu0
      %v215 = vpop.trf.xlu0
      %v216 = vpop.trf.xlu0
      %v217 = vpop.trf.xlu0
      %v218 = vpop.trf.xlu0
      %v219 = vpop.trf.xlu0
      %vm220 = vcmask 64512
      %v222 = vsel %vm220, %v212, 0
      %vm224 = vcmask 1043456
      %v226 = vsel %vm224, %v203, 0
      %228 = vmatprep.subr.bf16.mxu0 0
      %229 = vmatpush1.bf16.msra.mxu0 %v226
      %230 = vmatprep.subr.bf16.mxu0 0
      %231 = vmatpush1.bf16.msra.mxu0 0
      %232 = vmatprep.subr.bf16.mxu0 0
      %233 = vmatpush1.bf16.msra.mxu0 0
      %234 = vmatprep.subr.bf16.mxu0 0
      %235 = vmatpush1.bf16.msra.mxu0 0
      %236 = vmatprep.subr.bf16.mxu0 0
      %237 = vmatpush1.bf16.msra.mxu0 0
      %238 = vmatprep.subr.bf16.mxu0 0
      %239 = vmatpush1.bf16.msra.mxu0 0
      %240 = vmatprep.subr.bf16.mxu0 0
      %241 = vmatpush1.bf16.msra.mxu0 0
      %242 = vmatprep.subr.bf16.mxu0 0
      %243 = vmatpush1.bf16.msra.mxu0 0
      %244 = vmatprep.subr.bf16.mxu0 0
      %245 = vmatpush1.bf16.msra.mxu0 0
      %246 = vmatprep.subr.bf16.mxu0 0
      %247 = vmatpush1.bf16.msra.mxu0 0
      %248 = vmatprep.subr.bf16.mxu0 0
      %249 = vmatpush1.bf16.msra.mxu0 0
      %250 = vmatprep.subr.bf16.mxu0 0
      %251 = vmatpush1.bf16.msra.mxu0 0
      %252 = vmatprep.subr.bf16.mxu0 0
      %253 = vmatpush1.bf16.msra.mxu0 0
      %254 = vmatprep.subr.bf16.mxu0 0
      %255 = vmatpush1.bf16.msra.mxu0 0
      %256 = vmatprep.subr.bf16.mxu0 0
      %257 = vmatpush1.bf16.msra.mxu0 0
      %258 = vmatprep.subr.bf16.mxu0 0
      %259 = vmatpush1.bf16.msra.mxu0 0
      %260 = vmatprep.mubr.bf16.mxu0 0
      %261 = vmatmul.mubr.bf16.gmra.mrb[0].mxu0 %v222
      %v262 = vpop.f32.mrb[0].mxu0
      %v263 = vadd.f32 0.0, %v262
      %v264 = vpop.f32.mrb[0].mxu0
      %v265 = vpop.f32.mrb[0].mxu0
      %v266 = vpop.f32.mrb[0].mxu0
      %267 = vdwg.mxu0
      %v269 = vsel %vm220, %v201, 0
      %271 = vmatprep.subr.mxu0 0.0
      %272 = vmatpush1.msra.mxu0 %v263
      %273 = vmatprep.subr.mxu0 0.0
      %274 = vmatpush1.msra.mxu0 0.0
      %275 = vmatprep.subr.mxu0 0.0
      %276 = vmatpush1.msra.mxu0 0.0
      %277 = vmatprep.subr.mxu0 0.0
      %278 = vmatpush1.msra.mxu0 0.0
      %279 = vmatprep.subr.mxu0 0.0
      %280 = vmatpush1.msra.mxu0 0.0
      %281 = vmatprep.subr.mxu0 0.0
      %282 = vmatpush1.msra.mxu0 0.0
      %283 = vmatprep.subr.mxu0 0.0
      %284 = vmatpush1.msra.mxu0 0.0
      %285 = vmatprep.subr.mxu0 0.0
      %286 = vmatpush1.msra.mxu0 0.0
      %287 = vmatprep.subr.mxu0 0.0
      %288 = vmatpush1.msra.mxu0 0.0
      %289 = vmatprep.subr.mxu0 0.0
      %290 = vmatpush1.msra.mxu0 0.0
      %291 = vmatprep.subr.mxu0 0.0
      %292 = vmatpush1.msra.mxu0 0.0
      %293 = vmatprep.subr.mxu0 0.0
      %294 = vmatpush1.msra.mxu0 0.0
      %295 = vmatprep.subr.mxu0 0.0
      %296 = vmatpush1.msra.mxu0 0.0
      %297 = vmatprep.subr.mxu0 0.0
      %298 = vmatpush1.msra.mxu0 0.0
      %299 = vmatprep.subr.mxu0 0.0
      %300 = vmatpush1.msra.mxu0 0.0
      %301 = vmatprep.subr.mxu0 0.0
      %302 = vmatpush1.msra.mxu0 0.0
      %303 = vmatprep.subr.mxu0 0.0
      %304 = vmatpush1.msra.mxu0 0.0
      %305 = vmatprep.subr.mxu0 0.0
      %306 = vmatpush1.msra.mxu0 0.0
      %307 = vmatprep.subr.mxu0 0.0
      %308 = vmatpush1.msra.mxu0 0.0
      %309 = vmatprep.subr.mxu0 0.0
      %310 = vmatpush1.msra.mxu0 0.0
      %311 = vmatprep.subr.mxu0 0.0
      %312 = vmatpush1.msra.mxu0 0.0
      %313 = vmatprep.subr.mxu0 0.0
      %314 = vmatpush1.msra.mxu0 0.0
      %315 = vmatprep.subr.mxu0 0.0
      %316 = vmatpush1.msra.mxu0 0.0
      %317 = vmatprep.subr.mxu0 0.0
      %318 = vmatpush1.msra.mxu0 0.0
      %319 = vmatprep.subr.mxu0 0.0
      %320 = vmatpush1.msra.mxu0 0.0
      %321 = vmatprep.subr.mxu0 0.0
      %322 = vmatpush1.msra.mxu0 0.0
      %323 = vmatprep.subr.mxu0 0.0
      %324 = vmatpush1.msra.mxu0 0.0
      %325 = vmatprep.subr.mxu0 0.0
      %326 = vmatpush1.msra.mxu0 0.0
      %327 = vmatprep.subr.mxu0 0.0
      %328 = vmatpush1.msra.mxu0 0.0
      %329 = vmatprep.subr.mxu0 0.0
      %330 = vmatpush1.msra.mxu0 0.0
      %331 = vmatprep.subr.mxu0 0.0
      %332 = vmatpush1.msra.mxu0 0.0
      %333 = vmatprep.subr.mxu0 0.0
      %334 = vmatpush1.msra.mxu0 0.0
      %335 = vmatprep.mubr.bf16.mxu0 0
      %336 = vmatmul.mubr.bf16.gmra.mrb[0].mxu0 %v269
      %v337 = vpop.f32.mrb[0].mxu0
      %v338 = vadd.f32 0.0, %v337
      %v339 = vpop.f32.mrb[0].mxu0
      %v340 = vpop.f32.mrb[0].mxu0
      %v341 = vpop.f32.mrb[0].mxu0
      %342 = vdwg.mxu0
      %v343 = vmul.f32 %v338, 0.125
      %344 = vst.msk [vmem:[%s199] sm:$0xff] %vm220, %v343
      %v346 = vunpack.c.l.b16 %v202
      %v347 = vpack.c.b16 %v346, %v346
      %348 = vrot.lane.b32.xlu0 %v347, 120
      %v349 = vpop.permute.xlu0 %348
      %351 = vxpose.xlu0.c.b16.start [1/8] %v349, 128
      %352 = vxpose.xlu0.c.b16.cont [2/8] 0, 128
      %353 = vxpose.xlu0.c.b16.cont [3/8] 0, 128
      %354 = vxpose.xlu0.c.b16.cont [4/8] 0, 128
      %355 = vxpose.xlu0.c.b16.cont [5/8] 0, 128
      %356 = vxpose.xlu0.c.b16.cont [6/8] 0, 128
      %357 = vxpose.xlu0.c.b16.cont [7/8] 0, 128
      %358 = vxpose.xlu0.c.b16.end [8/8] 0, 128
      %v359 = vpop.trf.xlu0
      %v360 = vpop.trf.xlu0
      %v361 = vpop.trf.xlu0
      %v362 = vpop.trf.xlu0
      %v363 = vpop.trf.xlu0
      %v364 = vpop.trf.xlu0
      %v365 = vpop.trf.xlu0
      %v366 = vpop.trf.xlu0
      %v368 = vunpack.c.l.b16 %v203
      %v369 = vpack.c.b16 %v368, %v368
      %370 = vrot.lane.b32.xlu0 %v369, 120
      %v371 = vpop.permute.xlu0 %370
      %v373 = vsel %vm220, %v359, 0
      %v376 = vsel %vm224, %v371, 0
      %378 = vmatprep.subr.bf16.mxu0 0
      %379 = vmatpush1.bf16.msra.mxu0 %v376
      %380 = vmatprep.subr.bf16.mxu0 0
      %381 = vmatpush1.bf16.msra.mxu0 0
      %382 = vmatprep.subr.bf16.mxu0 0
      %383 = vmatpush1.bf16.msra.mxu0 0
      %384 = vmatprep.subr.bf16.mxu0 0
      %385 = vmatpush1.bf16.msra.mxu0 0
      %386 = vmatprep.subr.bf16.mxu0 0
      %387 = vmatpush1.bf16.msra.mxu0 0
      %388 = vmatprep.subr.bf16.mxu0 0
      %389 = vmatpush1.bf16.msra.mxu0 0
      %390 = vmatprep.subr.bf16.mxu0 0
      %391 = vmatpush1.bf16.msra.mxu0 0
      %392 = vmatprep.subr.bf16.mxu0 0
      %393 = vmatpush1.bf16.msra.mxu0 0
      %394 = vmatprep.subr.bf16.mxu0 0
      %395 = vmatpush1.bf16.msra.mxu0 0
      %396 = vmatprep.subr.bf16.mxu0 0
      %397 = vmatpush1.bf16.msra.mxu0 0
      %398 = vmatprep.subr.bf16.mxu0 0
      %399 = vmatpush1.bf16.msra.mxu0 0
      %400 = vmatprep.subr.bf16.mxu0 0
      %401 = vmatpush1.bf16.msra.mxu0 0
      %402 = vmatprep.subr.bf16.mxu0 0
      %403 = vmatpush1.bf16.msra.mxu0 0
      %404 = vmatprep.subr.bf16.mxu0 0
      %405 = vmatpush1.bf16.msra.mxu0 0
      %406 = vmatprep.subr.bf16.mxu0 0
      %407 = vmatpush1.bf16.msra.mxu0 0
      %408 = vmatprep.subr.bf16.mxu0 0
      %409 = vmatpush1.bf16.msra.mxu0 0
      %410 = vmatprep.mubr.bf16.mxu0 0
      %411 = vmatmul.mubr.bf16.gmra.mrb[0].mxu0 %v373
      %v412 = vpop.f32.mrb[0].mxu0
      %v413 = vadd.f32 0.0, %v412
      %v414 = vpop.f32.mrb[0].mxu0
      %v415 = vpop.f32.mrb[0].mxu0
      %v416 = vpop.f32.mrb[0].mxu0
      %417 = vdwg.mxu0
      %v419 = vunpack.c.l.b16 %v201
      %v420 = vpack.c.b16 %v419, %v419
      %421 = vrot.lane.b32.xlu0 %v420, 120
      %v422 = vpop.permute.xlu0 %421
      %v424 = vsel %vm220, %v422, 0
      %426 = vmatprep.subr.mxu0 0.0
      %427 = vmatpush1.msra.mxu0 %v413
      %428 = vmatprep.subr.mxu0 0.0
      %429 = vmatpush1.msra.mxu0 0.0
      %430 = vmatprep.subr.mxu0 0.0
      %431 = vmatpush1.msra.mxu0 0.0
      %432 = vmatprep.subr.mxu0 0.0
      %433 = vmatpush1.msra.mxu0 0.0
      %434 = vmatprep.subr.mxu0 0.0
      %435 = vmatpush1.msra.mxu0 0.0
      %436 = vmatprep.subr.mxu0 0.0
      %437 = vmatpush1.msra.mxu0 0.0
      %438 = vmatprep.subr.mxu0 0.0
      %439 = vmatpush1.msra.mxu0 0.0
      %440 = vmatprep.subr.mxu0 0.0
      %441 = vmatpush1.msra.mxu0 0.0
      %442 = vmatprep.subr.mxu0 0.0
      %443 = vmatpush1.msra.mxu0 0.0
      %444 = vmatprep.subr.mxu0 0.0
      %445 = vmatpush1.msra.mxu0 0.0
      %446 = vmatprep.subr.mxu0 0.0
      %447 = vmatpush1.msra.mxu0 0.0
      %448 = vmatprep.subr.mxu0 0.0
      %449 = vmatpush1.msra.mxu0 0.0
      %450 = vmatprep.subr.mxu0 0.0
      %451 = vmatpush1.msra.mxu0 0.0
      %452 = vmatprep.subr.mxu0 0.0
      %453 = vmatpush1.msra.mxu0 0.0
      %454 = vmatprep.subr.mxu0 0.0
      %455 = vmatpush1.msra.mxu0 0.0
      %456 = vmatprep.subr.mxu0 0.0
      %457 = vmatpush1.msra.mxu0 0.0
      %458 = vmatprep.subr.mxu0 0.0
      %459 = vmatpush1.msra.mxu0 0.0
      %460 = vmatprep.subr.mxu0 0.0
      %461 = vmatpush1.msra.mxu0 0.0
      %462 = vmatprep.subr.mxu0 0.0
      %463 = vmatpush1.msra.mxu0 0.0
      %464 = vmatprep.subr.mxu0 0.0
      %465 = vmatpush1.msra.mxu0 0.0
      %466 = vmatprep.subr.mxu0 0.0
      %467 = vmatpush1.msra.mxu0 0.0
      %468 = vmatprep.subr.mxu0 0.0
      %469 = vmatpush1.msra.mxu0 0.0
      %470 = vmatprep.subr.mxu0 0.0
      %471 = vmatpush1.msra.mxu0 0.0
      %472 = vmatprep.subr.mxu0 0.0
      %473 = vmatpush1.msra.mxu0 0.0
      %474 = vmatprep.subr.mxu0 0.0
      %475 = vmatpush1.msra.mxu0 0.0
      %476 = vmatprep.subr.mxu0 0.0
      %477 = vmatpush1.msra.mxu0 0.0
      %478 = vmatprep.subr.mxu0 0.0
      %479 = vmatpush1.msra.mxu0 0.0
      %480 = vmatprep.subr.mxu0 0.0
      %481 = vmatpush1.msra.mxu0 0.0
      %482 = vmatprep.subr.mxu0 0.0
      %483 = vmatpush1.msra.mxu0 0.0
      %484 = vmatprep.subr.mxu0 0.0
      %485 = vmatpush1.msra.mxu0 0.0
      %486 = vmatprep.subr.mxu0 0.0
      %487 = vmatpush1.msra.mxu0 0.0
      %488 = vmatprep.subr.mxu0 0.0
      %489 = vmatpush1.msra.mxu0 0.0
      %490 = vmatprep.mubr.bf16.mxu0 0
      %491 = vmatmul.mubr.bf16.gmra.mrb[0].mxu0 %v424
      %v492 = vpop.f32.mrb[0].mxu0
      %v493 = vadd.f32 0.0, %v492
      %v494 = vpop.f32.mrb[0].mxu0
      %v495 = vpop.f32.mrb[0].mxu0
      %v496 = vpop.f32.mrb[0].mxu0
      %497 = vdwg.mxu0
      %v498 = vmul.f32 %v493, 0.125
      %500 = vrot.lane.b32.xlu0 %v498, 8
      %v501 = vpop.permute.xlu0 %500
      %vm503 = vcmask 130112
      %504 = vst.msk [vmem:[%s199] sm:$0xff] %vm503, %v501
      %505 = vrot.lane.b32.xlu0 %v347, 112
      %v506 = vpop.permute.xlu0 %505
      %508 = vxpose.xlu0.c.b16.start [1/8] %v506, 128
      %509 = vxpose.xlu0.c.b16.cont [2/8] 0, 128
      %510 = vxpose.xlu0.c.b16.cont [3/8] 0, 128
      %511 = vxpose.xlu0.c.b16.cont [4/8] 0, 128
      %512 = vxpose.xlu0.c.b16.cont [5/8] 0, 128
      %513 = vxpose.xlu0.c.b16.cont [6/8] 0, 128
      %514 = vxpose.xlu0.c.b16.cont [7/8] 0, 128
      %515 = vxpose.xlu0.c.b16.end [8/8] 0, 128
      %v516 = vpop.trf.xlu0
      %v517 = vpop.trf.xlu0
      %v518 = vpop.trf.xlu0
      %v519 = vpop.trf.xlu0
      %v520 = vpop.trf.xlu0
      %v521 = vpop.trf.xlu0
      %v522 = vpop.trf.xlu0
      %v523 = vpop.trf.xlu0
      %524 = vrot.lane.b32.xlu0 %v369, 112
      %v525 = vpop.permute.xlu0 %524
      %v527 = vsel %vm220, %v516, 0
      %v530 = vsel %vm224, %v525, 0
      %532 = vmatprep.subr.bf16.mxu0 0
      %533 = vmatpush1.bf16.msra.mxu0 %v530
      %534 = vmatprep.subr.bf16.mxu0 0
      %535 = vmatpush1.bf16.msra.mxu0 0
      %536 = vmatprep.subr.bf16.mxu0 0
      %537 = vmatpush1.bf16.msra.mxu0 0
      %538 = vmatprep.subr.bf16.mxu0 0
      %539 = vmatpush1.bf16.msra.mxu0 0
      %540 = vmatprep.subr.bf16.mxu0 0
      %541 = vmatpush1.bf16.msra.mxu0 0
      %542 = vmatprep.subr.bf16.mxu0 0
      %543 = vmatpush1.bf16.msra.mxu0 0
      %544 = vmatprep.subr.bf16.mxu0 0
      %545 = vmatpush1.bf16.msra.mxu0 0
      %546 = vmatprep.subr.bf16.mxu0 0
      %547 = vmatpush1.bf16.msra.mxu0 0
      %548 = vmatprep.subr.bf16.mxu0 0
      %549 = vmatpush1.bf16.msra.mxu0 0
      %550 = vmatprep.subr.bf16.mxu0 0
      %551 = vmatpush1.bf16.msra.mxu0 0
      %552 = vmatprep.subr.bf16.mxu0 0
      %553 = vmatpush1.bf16.msra.mxu0 0
      %554 = vmatprep.subr.bf16.mxu0 0
      %555 = vmatpush1.bf16.msra.mxu0 0
      %556 = vmatprep.subr.bf16.mxu0 0
      %557 = vmatpush1.bf16.msra.mxu0 0
      %558 = vmatprep.subr.bf16.mxu0 0
      %559 = vmatpush1.bf16.msra.mxu0 0
      %560 = vmatprep.subr.bf16.mxu0 0
      %561 = vmatpush1.bf16.msra.mxu0 0
      %562 = vmatprep.subr.bf16.mxu0 0
      %563 = vmatpush1.bf16.msra.mxu0 0
      %564 = vmatprep.mubr.bf16.mxu0 0
      %565 = vmatmul.mubr.bf16.gmra.mrb[0].mxu0 %v527
      %v566 = vpop.f32.mrb[0].mxu0
      %v567 = vadd.f32 0.0, %v566
      %v568 = vpop.f32.mrb[0].mxu0
      %v569 = vpop.f32.mrb[0].mxu0
      %v570 = vpop.f32.mrb[0].mxu0
      %571 = vdwg.mxu0
      %572 = vrot.lane.b32.xlu0 %v420, 112
      %v573 = vpop.permute.xlu0 %572
      %v575 = vsel %vm220, %v573, 0
      %577 = vmatprep.subr.mxu0 0.0
      %578 = vmatpush1.msra.mxu0 %v567
      %579 = vmatprep.subr.mxu0 0.0
      %580 = vmatpush1.msra.mxu0 0.0
      %581 = vmatprep.subr.mxu0 0.0
      %582 = vmatpush1.msra.mxu0 0.0
      %583 = vmatprep.subr.mxu0 0.0
      %584 = vmatpush1.msra.mxu0 0.0
      %585 = vmatprep.subr.mxu0 0.0
      %586 = vmatpush1.msra.mxu0 0.0
      %587 = vmatprep.subr.mxu0 0.0
      %588 = vmatpush1.msra.mxu0 0.0
      %589 = vmatprep.subr.mxu0 0.0
      %590 = vmatpush1.msra.mxu0 0.0
      %591 = vmatprep.subr.mxu0 0.0
      %592 = vmatpush1.msra.mxu0 0.0
      %593 = vmatprep.subr.mxu0 0.0
      %594 = vmatpush1.msra.mxu0 0.0
      %595 = vmatprep.subr.mxu0 0.0
      %596 = vmatpush1.msra.mxu0 0.0
      %597 = vmatprep.subr.mxu0 0.0
      %598 = vmatpush1.msra.mxu0 0.0
      %599 = vmatprep.subr.mxu0 0.0
      %600 = vmatpush1.msra.mxu0 0.0
      %601 = vmatprep.subr.mxu0 0.0
      %602 = vmatpush1.msra.mxu0 0.0
      %603 = vmatprep.subr.mxu0 0.0
      %604 = vmatpush1.msra.mxu0 0.0
      %605 = vmatprep.subr.mxu0 0.0
      %606 = vmatpush1.msra.mxu0 0.0
      %607 = vmatprep.subr.mxu0 0.0
      %608 = vmatpush1.msra.mxu0 0.0
      %609 = vmatprep.subr.mxu0 0.0
      %610 = vmatpush1.msra.mxu0 0.0
      %611 = vmatprep.subr.mxu0 0.0
      %612 = vmatpush1.msra.mxu0 0.0
      %613 = vmatprep.subr.mxu0 0.0
      %614 = vmatpush1.msra.mxu0 0.0
      %615 = vmatprep.subr.mxu0 0.0
      %616 = vmatpush1.msra.mxu0 0.0
      %617 = vmatprep.subr.mxu0 0.0
      %618 = vmatpush1.msra.mxu0 0.0
      %619 = vmatprep.subr.mxu0 0.0
      %620 = vmatpush1.msra.mxu0 0.0
      %621 = vmatprep.subr.mxu0 0.0
      %622 = vmatpush1.msra.mxu0 0.0
      %623 = vmatprep.subr.mxu0 0.0
      %624 = vmatpush1.msra.mxu0 0.0
      %625 = vmatprep.subr.mxu0 0.0
      %626 = vmatpush1.msra.mxu0 0.0
      %627 = vmatprep.subr.mxu0 0.0
      %628 = vmatpush1.msra.mxu0 0.0
      %629 = vmatprep.subr.mxu0 0.0
      %630 = vmatpush1.msra.mxu0 0.0
      %631 = vmatprep.subr.mxu0 0.0
      %632 = vmatpush1.msra.mxu0 0.0
      %633 = vmatprep.subr.mxu0 0.0
      %634 = vmatpush1.msra.mxu0 0.0
      %635 = vmatprep.subr.mxu0 0.0
      %636 = vmatpush1.msra.mxu0 0.0
      %637 = vmatprep.subr.mxu0 0.0
      %638 = vmatpush1.msra.mxu0 0.0
      %639 = vmatprep.subr.mxu0 0.0
      %640 = vmatpush1.msra.mxu0 0.0
      %641 = vmatprep.mubr.bf16.mxu0 0
      %642 = vmatmul.mubr.bf16.gmra.mrb[0].mxu0 %v575
      %v643 = vpop.f32.mrb[0].mxu0
      %v644 = vadd.f32 0.0, %v643
      %v645 = vpop.f32.mrb[0].mxu0
      %v646 = vpop.f32.mrb[0].mxu0
      %v647 = vpop.f32.mrb[0].mxu0
      %648 = vdwg.mxu0
      %v649 = vmul.f32 %v644, 0.125
      %651 = vrot.lane.b32.xlu0 %v649, 16
      %v652 = vpop.permute.xlu0 %651
      %vm654 = vcmask 195712
      %655 = vst.msk [vmem:[%s199] sm:$0xff] %vm654, %v652
      %656 = vrot.lane.b32.xlu0 %v347, 104
      %v657 = vpop.permute.xlu0 %656
      %659 = vxpose.xlu0.c.b16.start [1/8] %v657, 128
      %660 = vxpose.xlu0.c.b16.cont [2/8] 0, 128
      %661 = vxpose.xlu0.c.b16.cont [3/8] 0, 128
      %662 = vxpose.xlu0.c.b16.cont [4/8] 0, 128
      %663 = vxpose.xlu0.c.b16.cont [5/8] 0, 128
      %664 = vxpose.xlu0.c.b16.cont [6/8] 0, 128
      %665 = vxpose.xlu0.c.b16.cont [7/8] 0, 128
      %666 = vxpose.xlu0.c.b16.end [8/8] 0, 128
      %v667 = vpop.trf.xlu0
      %v668 = vpop.trf.xlu0
      %v669 = vpop.trf.xlu0
      %v670 = vpop.trf.xlu0
      %v671 = vpop.trf.xlu0
      %v672 = vpop.trf.xlu0
      %v673 = vpop.trf.xlu0
      %v674 = vpop.trf.xlu0
      %675 = vrot.lane.b32.xlu0 %v369, 104
      %v676 = vpop.permute.xlu0 %675
      %v678 = vsel %vm220, %v667, 0
      %v681 = vsel %vm224, %v676, 0
      %683 = vmatprep.subr.bf16.mxu0 0
      %684 = vmatpush1.bf16.msra.mxu0 %v681
      %685 = vmatprep.subr.bf16.mxu0 0
      %686 = vmatpush1.bf16.msra.mxu0 0
      %687 = vmatprep.subr.bf16.mxu0 0
      %688 = vmatpush1.bf16.msra.mxu0 0
      %689 = vmatprep.subr.bf16.mxu0 0
      %690 = vmatpush1.bf16.msra.mxu0 0
      %691 = vmatprep.subr.bf16.mxu0 0
      %692 = vmatpush1.bf16.msra.mxu0 0
      %693 = vmatprep.subr.bf16.mxu0 0
      %694 = vmatpush1.bf16.msra.mxu0 0
      %695 = vmatprep.subr.bf16.mxu0 0
      %696 = vmatpush1.bf16.msra.mxu0 0
      %697 = vmatprep.subr.bf16.mxu0 0
      %698 = vmatpush1.bf16.msra.mxu0 0
      %699 = vmatprep.subr.bf16.mxu0 0
      %700 = vmatpush1.bf16.msra.mxu0 0
      %701 = vmatprep.subr.bf16.mxu0 0
      %702 = vmatpush1.bf16.msra.mxu0 0
      %703 = vmatprep.subr.bf16.mxu0 0
      %704 = vmatpush1.bf16.msra.mxu0 0
      %705 = vmatprep.subr.bf16.mxu0 0
      %706 = vmatpush1.bf16.msra.mxu0 0
      %707 = vmatprep.subr.bf16.mxu0 0
      %708 = vmatpush1.bf16.msra.mxu0 0
      %709 = vmatprep.subr.bf16.mxu0 0
      %710 = vmatpush1.bf16.msra.mxu0 0
      %711 = vmatprep.subr.bf16.mxu0 0
      %712 = vmatpush1.bf16.msra.mxu0 0
      %713 = vmatprep.subr.bf16.mxu0 0
      %714 = vmatpush1.bf16.msra.mxu0 0
      %715 = vmatprep.mubr.bf16.mxu0 0
      %716 = vmatmul.mubr.bf16.gmra.mrb[0].mxu0 %v678
      %v717 = vpop.f32.mrb[0].mxu0
      %v718 = vadd.f32 0.0, %v717
      %v719 = vpop.f32.mrb[0].mxu0
      %v720 = vpop.f32.mrb[0].mxu0
      %v721 = vpop.f32.mrb[0].mxu0
      %722 = vdwg.mxu0
      %723 = vrot.lane.b32.xlu0 %v420, 104
      %v724 = vpop.permute.xlu0 %723
      %v726 = vsel %vm220, %v724, 0
      %728 = vmatprep.subr.mxu0 0.0
      %729 = vmatpush1.msra.mxu0 %v718
      %730 = vmatprep.subr.mxu0 0.0
      %731 = vmatpush1.msra.mxu0 0.0
      %732 = vmatprep.subr.mxu0 0.0
      %733 = vmatpush1.msra.mxu0 0.0
      %734 = vmatprep.subr.mxu0 0.0
      %735 = vmatpush1.msra.mxu0 0.0
      %736 = vmatprep.subr.mxu0 0.0
      %737 = vmatpush1.msra.mxu0 0.0
      %738 = vmatprep.subr.mxu0 0.0
      %739 = vmatpush1.msra.mxu0 0.0
      %740 = vmatprep.subr.mxu0 0.0
      %741 = vmatpush1.msra.mxu0 0.0
      %742 = vmatprep.subr.mxu0 0.0
      %743 = vmatpush1.msra.mxu0 0.0
      %744 = vmatprep.subr.mxu0 0.0
      %745 = vmatpush1.msra.mxu0 0.0
      %746 = vmatprep.subr.mxu0 0.0
      %747 = vmatpush1.msra.mxu0 0.0
      %748 = vmatprep.subr.mxu0 0.0
      %749 = vmatpush1.msra.mxu0 0.0
      %750 = vmatprep.subr.mxu0 0.0
      %751 = vmatpush1.msra.mxu0 0.0
      %752 = vmatprep.subr.mxu0 0.0
      %753 = vmatpush1.msra.mxu0 0.0
      %754 = vmatprep.subr.mxu0 0.0
      %755 = vmatpush1.msra.mxu0 0.0
      %756 = vmatprep.subr.mxu0 0.0
      %757 = vmatpush1.msra.mxu0 0.0
      %758 = vmatprep.subr.mxu0 0.0
      %759 = vmatpush1.msra.mxu0 0.0
      %760 = vmatprep.subr.mxu0 0.0
      %761 = vmatpush1.msra.mxu0 0.0
      %762 = vmatprep.subr.mxu0 0.0
      %763 = vmatpush1.msra.mxu0 0.0
      %764 = vmatprep.subr.mxu0 0.0
      %765 = vmatpush1.msra.mxu0 0.0
      %766 = vmatprep.subr.mxu0 0.0
      %767 = vmatpush1.msra.mxu0 0.0
      %768 = vmatprep.subr.mxu0 0.0
      %769 = vmatpush1.msra.mxu0 0.0
      %770 = vmatprep.subr.mxu0 0.0
      %771 = vmatpush1.msra.mxu0 0.0
      %772 = vmatprep.subr.mxu0 0.0
      %773 = vmatpush1.msra.mxu0 0.0
      %774 = vmatprep.subr.mxu0 0.0
      %775 = vmatpush1.msra.mxu0 0.0
      %776 = vmatprep.subr.mxu0 0.0
      %777 = vmatpush1.msra.mxu0 0.0
      %778 = vmatprep.subr.mxu0 0.0
      %779 = vmatpush1.msra.mxu0 0.0
      %780 = vmatprep.subr.mxu0 0.0
      %781 = vmatpush1.msra.mxu0 0.0
      %782 = vmatprep.subr.mxu0 0.0
      %783 = vmatpush1.msra.mxu0 0.0
      %784 = vmatprep.subr.mxu0 0.0
      %785 = vmatpush1.msra.mxu0 0.0
      %786 = vmatprep.subr.mxu0 0.0
      %787 = vmatpush1.msra.mxu0 0.0
      %788 = vmatprep.subr.mxu0 0.0
      %789 = vmatpush1.msra.mxu0 0.0
      %790 = vmatprep.subr.mxu0 0.0
      %791 = vmatpush1.msra.mxu0 0.0
      %792 = vmatprep.mubr.bf16.mxu0 0
      %793 = vmatmul.mubr.bf16.gmra.mrb[0].mxu0 %v726
      %v794 = vpop.f32.mrb[0].mxu0
      %v795 = vadd.f32 0.0, %v794
      %v796 = vpop.f32.mrb[0].mxu0
      %v797 = vpop.f32.mrb[0].mxu0
      %v798 = vpop.f32.mrb[0].mxu0
      %799 = vdwg.mxu0
      %v800 = vmul.f32 %v795, 0.125
      %802 = vrot.lane.b32.xlu0 %v800, 24
      %v803 = vpop.permute.xlu0 %802
      %vm805 = vcmask 261312
      %806 = vst.msk [vmem:[%s199] sm:$0xff] %vm805, %v803
      %p807 = scmp.lt.s32.totalorder %s14, 1
      %s808 = scalar_select %p807, %s14, 1
      %s809 = smul.addr %s808, 8
      %s810 = scalar_lea.vmem %s3, %s809
      // Predicated region
      $region33: #{ssa_forward.4} parent=31 // pred_check
        %p811 = pneg %p110
      $region34: #{ssa_forward.4} parent=31 // pred_check_branch
        %813 = sbr.rel (%p811) target = $region36
      $region35: #{ssa_forward.4} parent=31 // pred_region
        _
      $region36: #{ssa_forward.4} parent=31 // pred_fallthru
        _
    $region32: #{ssa_forward.4} parent=5 // pred_fallthru
      _
    %p814 = scmp.le.s32.totalorder 2, %s9
    // Predicated region
    $region37: #{ssa_forward.4} parent=5 // pred_check
      %p815 = pneg %p814
    $region38: #{ssa_forward.4} parent=5 // pred_check_branch
      %817 = sbr.rel (%p815) target = $region40
    $region39: #{ssa_forward.4} parent=5 // pred_region
      %s818 = ssub.s32 %s9, 2
      // Predicated region
      $region41: #{ssa_forward.4} parent=39 // pred_check
        %p819 = pneg %p116
      $region42: #{ssa_forward.4} parent=39 // pred_check_branch
        %821 = sbr.rel (%p819) target = $region44
      $region43: #{ssa_forward.4} parent=39 // pred_region
        %p822 = scmp.lt.s32.totalorder %s15, 1
        %s823 = scalar_select %p822, %s15, 1
        %s824 = smul.addr %s823, 8
        %s825 = scalar_lea.vmem %s3, %s824
      $region44: #{ssa_forward.4} parent=39 // pred_fallthru
        _
    $region40: #{ssa_forward.4} parent=5 // pred_fallthru
      _
  $region6: #{ssa_forward.4} parent=0 // loop_footer
    %s13 = sadd.s32 1, %s9
  $region7: #{ssa_forward.4} parent=0 // loop_footer_branch
    %8 = sbr.rel target = $region3
  $region8: #{ssa_forward.4} parent=0 // loop_exit
    _

// kernel: ssa_forward.3
$region0: #{ssa_forward.3}
  #allocation0 [shape = 'u32[]', space=smem, size = 0x4, offset = 0x4, fixed_abs, tag = 'smem constant byte address 0x4 - core index']
  #allocation1 [shape = 'u32[144,128]{1,0:T(1,128)}', space=vmem, size = 0x12000, scoped, tag = 'internal scratch']
  %s0 = inlined_call_operand.vmem [shape: f32[2,32,8], index: 0, kind: input, shape index: {}]
  %s1 = inlined_call_operand.vmem [shape: f32[2,32,8], index: 1, kind: input, shape index: {}]
  %s2 = inlined_call_operand.vmem [shape: f32[2,32,8], index: 2, kind: input, shape index: {}]
  %s3 = inlined_call_operand.vmem [shape: f32[32,32], index: 3, kind: input, shape index: {}]
  %s4 = inlined_call_operand.vmem [shape: f32[32,32], index: 4, kind: input, shape index: {}]
  %s5 = inlined_call_operand.vmem [shape: f32[32,32], index: 5, kind: input, shape index: {}]
  %s6 = inlined_call_operand.vmem [shape: bf16[2,32,8], index: 6, kind: output, shape index: {0}]
  %s7 = inlined_call_operand.vmem [shape: bf16[2,32,8], index: 7, kind: output, shape index: {1}]
  %s8 = inlined_call_operand.vmem [shape: bf16[2,32,8], index: 8, kind: output, shape index: {2}]
  %9 = xla_tuple %s6, %s7, %s8
  %s10 = sld [smem:[#allocation0]]
  $region73: #{ssa_forward.3} parent=0
    _
  %s12 = ssub.s32 1, %s10
  %s13 = scalar_select 0, %s12, %s10
  loop: start=0, step=1, limit=4
  $region2: #{ssa_forward.3} parent=0 // loop_pre_header
    _
  $region3: #{ssa_forward.3} parent=0 // loop_header
    %s15 = sphi 0, %s19
    %p16 = scmp.ge.s32.totalorder %s15, 4
    %s22 = sphi 0, %s34
    %s23 = sphi 0, %s30
    %s24 = sphi 0, %s22
    %s25 = sphi 0, %s23
    %s26 = sphi 0, %s24
    %s27 = sphi 0, %s25
    %s39 = sphi 0, %s41
    %s42 = sphi 0, %s39
    %s43 = sphi 0, %s42
    %s59 = sphi 0, %s43
    %s67 = sphi 0, %s69
    %s70 = sphi 0, %s67
    %s71 = sphi 0, %s70
    %s87 = sphi 0, %s71
    %s95 = sphi 0, %s97
    %s98 = sphi 0, %s95
    %s99 = sphi 0, %s98
    %s115 = sphi 0, %s99
    %s119 = sphi 0, %s119
    %s121 = sphi 0, %s119
    %s122 = sphi 0, %s121
    %s136 = sphi 0, %s122
    %s140 = sphi 0, %s140
    %s142 = sphi 0, %s140
    %s143 = sphi 0, %s142
    %s157 = sphi 0, %s143
    %s161 = sphi 0, %s161
    %s163 = sphi 0, %s161
    %s164 = sphi 0, %s163
    %s178 = sphi 0, %s164
    %s186 = sphi 0, %s188
    %s189 = sphi 0, %s186
    %s190 = sphi 0, %s189
    %s206 = sphi 0, %s190
    %s214 = sphi 0, %s216
    %s217 = sphi 0, %s214
    %s218 = sphi 0, %s217
    %s234 = sphi 0, %s218
    %s242 = sphi 0, %s244
    %s245 = sphi 0, %s242
    %s246 = sphi 0, %s245
    %s262 = sphi 0, %s246
  $region4: #{ssa_forward.3} parent=0 // loop_header_branch
    %18 = sbr.rel (%p16) target = $region8
  $region5: #{ssa_forward.3} parent=0 // loop_body
    %s20 = ssub.s32 %s15, 1
    %s21 = ssub.s32 %s15, 2
    %s28 = sadd.s32 1, %s23
    %p29 = scmp.ge.s32.totalorder %s28, 1
    %s30 = scalar_select %p29, 0, %s28
    %s31 = sadd.s32 1, %s22
    %s32 = scalar_select %p29, %s31, %s22
    %p33 = scmp.ge.s32.totalorder %s32, 2
    %s34 = scalar_select %p33, 0, %s32
    %s35 = ssub.s32 %s22, %s34
    %s36 = ssub.s32 %s23, %s30
    %s37 = sor.u32 %s35, %s36
    %p38 = scmp.eq.s32.totalorder %s37, 0
    %s40 = sadd.s32 %s39, 1
    %s41 = scalar_select %p38, %s39, %s40
    %p44 = pneg %p38
    %p45 = scmp.eq.s32.totalorder %s15, 1
    %p46 = por %p44, %p45
    %p47 = scmp.ne.s32.totalorder %s39, %s42
    %p48 = scmp.eq.s32.totalorder %s15, 0
    %p49 = por %p47, %p48
    %p50 = scmp.ne.s32.totalorder %s39, %s42
    %p51 = scmp.eq.s32.totalorder %s20, 1
    %p52 = por %p50, %p51
    %p53 = scmp.ne.s32.totalorder %s42, %s43
    %p54 = scmp.eq.s32.totalorder %s20, 0
    %p55 = por %p53, %p54
    %p56 = scmp.ne.s32.totalorder %s42, %s43
    %p57 = scmp.eq.s32.totalorder %s21, 1
    %p58 = por %p56, %p57
    %p60 = scmp.ne.s32.totalorder %s43, %s59
    %p61 = scmp.eq.s32.totalorder %s21, 0
    %p62 = por %p60, %p61
    %s63 = ssub.s32 %s22, %s34
    %s64 = ssub.s32 %s23, %s30
    %s65 = sor.u32 %s63, %s64
    %p66 = scmp.eq.s32.totalorder %s65, 0
    %s68 = sadd.s32 %s67, 1
    %s69 = scalar_select %p66, %s67, %s68
    %p72 = pneg %p66
    %p73 = scmp.eq.s32.totalorder %s15, 1
    %p74 = por %p72, %p73
    %p75 = scmp.ne.s32.totalorder %s67, %s70
    %p76 = scmp.eq.s32.totalorder %s15, 0
    %p77 = por %p75, %p76
    %p78 = scmp.ne.s32.totalorder %s67, %s70
    %p79 = scmp.eq.s32.totalorder %s20, 1
    %p80 = por %p78, %p79
    %p81 = scmp.ne.s32.totalorder %s70, %s71
    %p82 = scmp.eq.s32.totalorder %s20, 0
    %p83 = por %p81, %p82
    %p84 = scmp.ne.s32.totalorder %s70, %s71
    %p85 = scmp.eq.s32.totalorder %s21, 1
    %p86 = por %p84, %p85
    %p88 = scmp.ne.s32.totalorder %s71, %s87
    %p89 = scmp.eq.s32.totalorder %s21, 0
    %p90 = por %p88, %p89
    %s91 = ssub.s32 %s22, %s34
    %s92 = ssub.s32 %s23, %s30
    %s93 = sor.u32 %s91, %s92
    %p94 = scmp.eq.s32.totalorder %s93, 0
    %s96 = sadd.s32 %s95, 1
    %s97 = scalar_select %p94, %s95, %s96
    %p100 = pneg %p94
    %p101 = scmp.eq.s32.totalorder %s15, 1
    %p102 = por %p100, %p101
    %p103 = scmp.ne.s32.totalorder %s95, %s98
    %p104 = scmp.eq.s32.totalorder %s15, 0
    %p105 = por %p103, %p104
    %p106 = scmp.ne.s32.totalorder %s95, %s98
    %p107 = scmp.eq.s32.totalorder %s20, 1
    %p108 = por %p106, %p107
    %p109 = scmp.ne.s32.totalorder %s98, %s99
    %p110 = scmp.eq.s32.totalorder %s20, 0
    %p111 = por %p109, %p110
    %p112 = scmp.ne.s32.totalorder %s98, %s99
    %p113 = scmp.eq.s32.totalorder %s21, 1
    %p114 = por %p112, %p113
    %p116 = scmp.ne.s32.totalorder %s99, %s115
    %p117 = scmp.eq.s32.totalorder %s21, 0
    %p118 = por %p116, %p117
    %s120 = sadd.s32 %s119, 1
    %p123 = scmp.eq.s32.totalorder %s15, 1
    %p124 = scmp.ne.s32.totalorder %s119, %s121
    %p125 = scmp.eq.s32.totalorder %s15, 0
    %p126 = por %p124, %p125
    %p127 = scmp.ne.s32.totalorder %s119, %s121
    %p128 = scmp.eq.s32.totalorder %s20, 1
    %p129 = por %p127, %p128
    %p130 = scmp.ne.s32.totalorder %s121, %s122
    %p131 = scmp.eq.s32.totalorder %s20, 0
    %p132 = por %p130, %p131
    %p133 = scmp.ne.s32.totalorder %s121, %s122
    %p134 = scmp.eq.s32.totalorder %s21, 1
    %p135 = por %p133, %p134
    %p137 = scmp.ne.s32.totalorder %s122, %s136
    %p138 = scmp.eq.s32.totalorder %s21, 0
    %p139 = por %p137, %p138
    %s141 = sadd.s32 %s140, 1
    %p144 = scmp.eq.s32.totalorder %s15, 1
    %p145 = scmp.ne.s32.totalorder %s140, %s142
    %p146 = scmp.eq.s32.totalorder %s15, 0
    %p147 = por %p145, %p146
    %p148 = scmp.ne.s32.totalorder %s140, %s142
    %p149 = scmp.eq.s32.totalorder %s20, 1
    %p150 = por %p148, %p149
    %p151 = scmp.ne.s32.totalorder %s142, %s143
    %p152 = scmp.eq.s32.totalorder %s20, 0
    %p153 = por %p151, %p152
    %p154 = scmp.ne.s32.totalorder %s142, %s143
    %p155 = scmp.eq.s32.totalorder %s21, 1
    %p156 = por %p154, %p155
    %p158 = scmp.ne.s32.totalorder %s143, %s157
    %p159 = scmp.eq.s32.totalorder %s21, 0
    %p160 = por %p158, %p159
    %s162 = sadd.s32 %s161, 1
    %p165 = scmp.eq.s32.totalorder %s15, 1
    %p166 = scmp.ne.s32.totalorder %s161, %s163
    %p167 = scmp.eq.s32.totalorder %s15, 0
    %p168 = por %p166, %p167
    %p169 = scmp.ne.s32.totalorder %s161, %s163
    %p170 = scmp.eq.s32.totalorder %s20, 1
    %p171 = por %p169, %p170
    %p172 = scmp.ne.s32.totalorder %s163, %s164
    %p173 = scmp.eq.s32.totalorder %s20, 0
    %p174 = por %p172, %p173
    %p175 = scmp.ne.s32.totalorder %s163, %s164
    %p176 = scmp.eq.s32.totalorder %s21, 1
    %p177 = por %p175, %p176
    %p179 = scmp.ne.s32.totalorder %s164, %s178
    %p180 = scmp.eq.s32.totalorder %s21, 0
    %p181 = por %p179, %p180
    %s182 = ssub.s32 %s22, %s34
    %s183 = ssub.s32 %s23, %s30
    %s184 = sor.u32 %s182, %s183
    %p185 = scmp.eq.s32.totalorder %s184, 0
    %s187 = sadd.s32 %s186, 1
    %s188 = scalar_select %p185, %s186, %s187
    %p191 = pneg %p185
    %p192 = scmp.eq.s32.totalorder %s15, 1
    %p193 = por %p191, %p192
    %p194 = scmp.ne.s32.totalorder %s186, %s189
    %p195 = scmp.eq.s32.totalorder %s15, 0
    %p196 = por %p194, %p195
    %p197 = scmp.ne.s32.totalorder %s186, %s189
    %p198 = scmp.eq.s32.totalorder %s20, 1
    %p199 = por %p197, %p198
    %p200 = scmp.ne.s32.totalorder %s189, %s190
    %p201 = scmp.eq.s32.totalorder %s20, 0
    %p202 = por %p200, %p201
    %p203 = scmp.ne.s32.totalorder %s189, %s190
    %p204 = scmp.eq.s32.totalorder %s21, 1
    %p205 = por %p203, %p204
    %p207 = scmp.ne.s32.totalorder %s190, %s206
    %p208 = scmp.eq.s32.totalorder %s21, 0
    %p209 = por %p207, %p208
    %s210 = ssub.s32 %s22, %s34
    %s211 = ssub.s32 %s23, %s30
    %s212 = sor.u32 %s210, %s211
    %p213 = scmp.eq.s32.totalorder %s212, 0
    %s215 = sadd.s32 %s214, 1
    %s216 = scalar_select %p213, %s214, %s215
    %p219 = pneg %p213
    %p220 = scmp.eq.s32.totalorder %s15, 1
    %p221 = por %p219, %p220
    %p222 = scmp.ne.s32.totalorder %s214, %s217
    %p223 = scmp.eq.s32.totalorder %s15, 0
    %p224 = por %p222, %p223
    %p225 = scmp.ne.s32.totalorder %s214, %s217
    %p226 = scmp.eq.s32.totalorder %s20, 1
    %p227 = por %p225, %p226
    %p228 = scmp.ne.s32.totalorder %s217, %s218
    %p229 = scmp.eq.s32.totalorder %s20, 0
    %p230 = por %p228, %p229
    %p231 = scmp.ne.s32.totalorder %s217, %s218
    %p232 = scmp.eq.s32.totalorder %s21, 1
    %p233 = por %p231, %p232
    %p235 = scmp.ne.s32.totalorder %s218, %s234
    %p236 = scmp.eq.s32.totalorder %s21, 0
    %p237 = por %p235, %p236
    %s238 = ssub.s32 %s22, %s34
    %s239 = ssub.s32 %s23, %s30
    %s240 = sor.u32 %s238, %s239
    %p241 = scmp.eq.s32.totalorder %s240, 0
    %s243 = sadd.s32 %s242, 1
    %s244 = scalar_select %p241, %s242, %s243
    %p247 = pneg %p241
    %p248 = scmp.eq.s32.totalorder %s15, 1
    %p249 = por %p247, %p248
    %p250 = scmp.ne.s32.totalorder %s242, %s245
    %p251 = scmp.eq.s32.totalorder %s15, 0
    %p252 = por %p250, %p251
    %p253 = scmp.ne.s32.totalorder %s242, %s245
    %p254 = scmp.eq.s32.totalorder %s20, 1
    %p255 = por %p253, %p254
    %p256 = scmp.ne.s32.totalorder %s245, %s246
    %p257 = scmp.eq.s32.totalorder %s20, 0
    %p258 = por %p256, %p257
    %p259 = scmp.ne.s32.totalorder %s245, %s246
    %p260 = scmp.eq.s32.totalorder %s21, 1
    %p261 = por %p259, %p260
    %p263 = scmp.ne.s32.totalorder %s246, %s262
    %p264 = scmp.eq.s32.totalorder %s21, 0
    %p265 = por %p263, %p264
    %p266 = scmp.le.s32.totalorder 1, %s15
    %p267 = scmp.lt.s32.totalorder %s15, 3
    %p268 = pnand %p266, %p267
    %p269 = pneg %p268
    // Predicated region
    $region9: #{ssa_forward.3} parent=5 // pred_check
      _
    $region10: #{ssa_forward.3} parent=5 // pred_check_branch
      %271 = sbr.rel (%p268) target = $region12
    $region11: #{ssa_forward.3} parent=5 // pred_region
      %s272 = ssub.s32 %s15, 1
      // Predicated region
      $region13: #{ssa_forward.3} parent=11 // pred_check
        %p273 = pneg %p132
      $region14: #{ssa_forward.3} parent=11 // pred_check_branch
        %275 = sbr.rel (%p273) target = $region16
      $region15: #{ssa_forward.3} parent=11 // pred_region
        _
      $region16: #{ssa_forward.3} parent=11 // pred_fallthru
        _
      // Predicated region
      $region17: #{ssa_forward.3} parent=11 // pred_check
        %p276 = pneg %p153
      $region18: #{ssa_forward.3} parent=11 // pred_check_branch
        %278 = sbr.rel (%p276) target = $region20
      $region19: #{ssa_forward.3} parent=11 // pred_region
        _
      $region20: #{ssa_forward.3} parent=11 // pred_fallthru
        _
      // Predicated region
      $region21: #{ssa_forward.3} parent=11 // pred_check
        %p279 = pneg %p174
      $region22: #{ssa_forward.3} parent=11 // pred_check_branch
        %281 = sbr.rel (%p279) target = $region24
      $region23: #{ssa_forward.3} parent=11 // pred_region
        _
      $region24: #{ssa_forward.3} parent=11 // pred_fallthru
        _
    $region12: #{ssa_forward.3} parent=5 // pred_fallthru
      _
    %p282 = scmp.lt.s32.totalorder %s15, 2
    // Predicated region
    $region25: #{ssa_forward.3} parent=5 // pred_check
      %p283 = pneg %p282
    $region26: #{ssa_forward.3} parent=5 // pred_check_branch
      %285 = sbr.rel (%p283) target = $region28
    $region27: #{ssa_forward.3} parent=5 // pred_region
      // Predicated region
      $region29: #{ssa_forward.3} parent=27 // pred_check
        %p286 = pneg %p49
      $region30: #{ssa_forward.3} parent=27 // pred_check_branch
        %288 = sbr.rel (%p286) target = $region32
      $region31: #{ssa_forward.3} parent=27 // pred_region
        %p289 = scmp.lt.s32.totalorder %s22, 1
        %s290 = scalar_select %p289, %s22, 1
        %p291 = scmp.lt.s32.totalorder %s23, 0
        %s292 = scalar_select %p291, %s23, 0
        %s293 = smul.addr %s290, 4
        %s294 = sadd.s32 %s292, %s293
        %s295 = smul.addr %s294, 8
        %s296 = scalar_lea.vmem %s0, %s295
      $region32: #{ssa_forward.3} parent=27 // pred_fallthru
        _
      // Predicated region
      $region33: #{ssa_forward.3} parent=27 // pred_check
        %p297 = pneg %p77
      $region34: #{ssa_forward.3} parent=27 // pred_check_branch
        %299 = sbr.rel (%p297) target = $region36
      $region35: #{ssa_forward.3} parent=27 // pred_region
        %p300 = scmp.lt.s32.totalorder %s22, 1
        %s301 = scalar_select %p300, %s22, 1
        %p302 = scmp.lt.s32.totalorder %s23, 0
        %s303 = scalar_select %p302, %s23, 0
        %s304 = smul.addr %s301, 4
        %s305 = sadd.s32 %s303, %s304
        %s306 = smul.addr %s305, 8
        %s307 = scalar_lea.vmem %s1, %s306
      $region36: #{ssa_forward.3} parent=27 // pred_fallthru
        _
      // Predicated region
      $region37: #{ssa_forward.3} parent=27 // pred_check
        %p308 = pneg %p105
      $region38: #{ssa_forward.3} parent=27 // pred_check_branch
        %310 = sbr.rel (%p308) target = $region40
      $region39: #{ssa_forward.3} parent=27 // pred_region
        %p311 = scmp.lt.s32.totalorder %s22, 1
        %s312 = scalar_select %p311, %s22, 1
        %p313 = scmp.lt.s32.totalorder %s23, 0
        %s314 = scalar_select %p313, %s23, 0
        %s315 = smul.addr %s312, 4
        %s316 = sadd.s32 %s314, %s315
        %s317 = smul.addr %s316, 8
        %s318 = scalar_lea.vmem %s2, %s317
      $region40: #{ssa_forward.3} parent=27 // pred_fallthru
        _
    $region28: #{ssa_forward.3} parent=5 // pred_fallthru
      _
    %p319 = scmp.le.s32.totalorder 1, %s15
    %p320 = scmp.lt.s32.totalorder %s15, 3
    %p321 = pnand %p319, %p320
    %p322 = pneg %p321
    // Predicated region
    $region41: #{ssa_forward.3} parent=5 // pred_check
      _
    $region42: #{ssa_forward.3} parent=5 // pred_check_branch
      %324 = sbr.rel (%p321) target = $region44
    $region43: #{ssa_forward.3} parent=5 // pred_region
      %s325 = ssub.s32 %s15, 1
      %p326 = scmp.lt.s32.totalorder %s24, 1
      %s327 = scalar_select %p326, %s24, 1
      %p328 = scmp.lt.s32.totalorder %s25, 0
      %s329 = scalar_select %p328, %s25, 0
      %s330 = smul.addr %s327, 4
      %s331 = sadd.s32 %s329, %s330
      %s332 = smul.addr %s331, 8
      %s333 = scalar_lea.vmem %s0, %s332
      %p334 = pneg %p55
      %p335 = pneg %p52
      %p336 = scmp.lt.s32.totalorder %s24, 1
      %s337 = scalar_select %p336, %s24, 1
      %p338 = scmp.lt.s32.totalorder %s25, 0
      %s339 = scalar_select %p338, %s25, 0
      %s340 = smul.addr %s337, 4
      %s341 = sadd.s32 %s339, %s340
      %s342 = smul.addr %s341, 8
      %s343 = scalar_lea.vmem %s1, %s342
      %p344 = pneg %p83
      %p345 = pneg %p80
      %p346 = scmp.lt.s32.totalorder %s24, 1
      %s347 = scalar_select %p346, %s24, 1
      %p348 = scmp.lt.s32.totalorder %s25, 0
      %s349 = scalar_select %p348, %s25, 0
      %s350 = smul.addr %s347, 4
      %s351 = sadd.s32 %s349, %s350
      %s352 = smul.addr %s351, 8
      %s353 = scalar_lea.vmem %s2, %s352
      %p354 = pneg %p111
      %p355 = pneg %p108
      %p356 = pneg %p132
      %p357 = pneg %p129
      %p358 = pneg %p153
      %p359 = pneg %p150
      %p360 = pneg %p174
      %p361 = pneg %p171
      %p362 = pneg %p202
      %p363 = pneg %p199
      %p364 = scmp.lt.s32.totalorder %s24, 1
      %s365 = scalar_select %p364, %s24, 1
      %p366 = scmp.lt.s32.totalorder %s25, 0
      %s367 = scalar_select %p366, %s25, 0
      %s368 = smul.addr %s365, 4
      %s369 = sadd.s32 %s367, %s368
      %s370 = smul.addr %s369, 4
      %s371 = scalar_lea.vmem %s6, %s370
      %p372 = pneg %p230
      %p373 = pneg %p227
      %p374 = scmp.lt.s32.totalorder %s24, 1
      %s375 = scalar_select %p374, %s24, 1
      %p376 = scmp.lt.s32.totalorder %s25, 0
      %s377 = scalar_select %p376, %s25, 0
      %s378 = smul.addr %s375, 4
      %s379 = sadd.s32 %s377, %s378
      %s380 = smul.addr %s379, 4
      %s381 = scalar_lea.vmem %s7, %s380
      %p382 = pneg %p258
      %p383 = pneg %p255
      %p384 = scmp.lt.s32.totalorder %s24, 1
      %s385 = scalar_select %p384, %s24, 1
      %p386 = scmp.lt.s32.totalorder %s25, 0
      %s387 = scalar_select %p386, %s25, 0
      %s388 = smul.addr %s385, 4
      %s389 = sadd.s32 %s387, %s388
      %s390 = smul.addr %s389, 4
      %s391 = scalar_lea.vmem %s8, %s390
      %p392 = scmp.lt.s32.totalorder %s24, 1
      %s393 = scalar_select %p392, %s24, 1
      %p394 = scmp.lt.s32.totalorder %s25, 0
      %s395 = scalar_select %p394, %s25, 0
      %s396 = smul.addr %s393, 4
      %s397 = sadd.s32 %s395, %s396
      %s398 = smul.addr %s397, 8
      %s399 = scalar_lea.vmem %s0, %s398
      %p400 = scmp.lt.s32.totalorder %s24, 1
      %s401 = scalar_select %p400, %s24, 1
      %p402 = scmp.lt.s32.totalorder %s25, 0
      %s403 = scalar_select %p402, %s25, 0
      %s404 = smul.addr %s401, 4
      %s405 = sadd.s32 %s403, %s404
      %s406 = smul.addr %s405, 8
      %s407 = scalar_lea.vmem %s1, %s406
      %p408 = scmp.lt.s32.totalorder %s24, 1
      %s409 = scalar_select %p408, %s24, 1
      %p410 = scmp.lt.s32.totalorder %s25, 0
      %s411 = scalar_select %p410, %s25, 0
      %s412 = smul.addr %s409, 4
      %s413 = sadd.s32 %s411, %s412
      %s414 = smul.addr %s413, 8
      %s415 = scalar_lea.vmem %s2, %s414
      %p416 = scmp.lt.s32.totalorder %s24, 1
      %s417 = scalar_select %p416, %s24, 1
      %p418 = scmp.lt.s32.totalorder %s25, 0
      %s419 = scalar_select %p418, %s25, 0
      %s420 = smul.addr %s417, 4
      %s421 = sadd.s32 %s419, %s420
      %s422 = smul.addr %s421, 4
      %s423 = scalar_lea.vmem %s6, %s422
      %p424 = scmp.lt.s32.totalorder %s24, 1
      %s425 = scalar_select %p424, %s24, 1
      %p426 = scmp.lt.s32.totalorder %s25, 0
      %s427 = scalar_select %p426, %s25, 0
      %s428 = smul.addr %s425, 4
      %s429 = sadd.s32 %s427, %s428
      %s430 = smul.addr %s429, 4
      %s431 = scalar_lea.vmem %s7, %s430
      %p432 = scmp.lt.s32.totalorder %s24, 1
      %s433 = scalar_select %p432, %s24, 1
      %p434 = scmp.lt.s32.totalorder %s25, 0
      %s435 = scalar_select %p434, %s25, 0
      %s436 = smul.addr %s433, 4
      %s437 = sadd.s32 %s435, %s436
      %s438 = smul.addr %s437, 4
      %s439 = scalar_lea.vmem %s8, %s438
      %v440 = vld [vmem:[%s3] sm:$0xff]
      %v441 = vld [vmem:[%s3 + $0x8] sm:$0xff]
      %v442 = vld [vmem:[%s3 + $0x10] sm:$0xff]
      %v443 = vld [vmem:[%s3 + $0x18] sm:$0xff]
      %v444 = vld [vmem:[%s399] sm:$0xff]
      %v445 = vld [vmem:[%s399 + $0x8] sm:$0xff]
      %v446 = vld [vmem:[%s399 + $0x10] sm:$0xff]
      %v447 = vld [vmem:[%s399 + $0x18] sm:$0xff]
      %vm448 = vcmask 261120
      %v450 = vsel %vm448, %v440, 0
      %v453 = vsel %vm448, %v441, 0
      %v456 = vsel %vm448, %v442, 0
      %v459 = vsel %vm448, %v443, 0
      %461 = vmatprep.subr.mxu0 0.0
      %462 = vmatpush1.msra.mxu0 %v444
      %463 = vmatprep.subr.mxu0 0.0
      %464 = vmatpush1.msra.mxu0 %v445
      %465 = vmatprep.subr.mxu0 0.0
      %466 = vmatpush1.msra.mxu0 %v446
      %467 = vmatprep.subr.mxu0 0.0
      %468 = vmatpush1.msra.mxu0 %v447
      %469 = vmatprep.subr.mxu0 0.0
      %470 = vmatpush1.msra.mxu0 0.0
      %471 = vmatprep.subr.mxu0 0.0
      %472 = vmatpush1.msra.mxu0 0.0
      %473 = vmatprep.subr.mxu0 0.0
      %474 = vmatpush1.msra.mxu0 0.0
      %475 = vmatprep.subr.mxu0 0.0
      %476 = vmatpush1.msra.mxu0 0.0
      %477 = vmatprep.subr.mxu0 0.0
      %478 = vmatpush1.msra.mxu0 0.0
      %479 = vmatprep.subr.mxu0 0.0
      %480 = vmatpush1.msra.mxu0 0.0
      %481 = vmatprep.subr.mxu0 0.0
      %482 = vmatpush1.msra.mxu0 0.0
      %483 = vmatprep.subr.mxu0 0.0
      %484 = vmatpush1.msra.mxu0 0.0
      %485 = vmatprep.subr.mxu0 0.0
      %486 = vmatpush1.msra.mxu0 0.0
      %487 = vmatprep.subr.mxu0 0.0
      %488 = vmatpush1.msra.mxu0 0.0
      %489 = vmatprep.subr.mxu0 0.0
      %490 = vmatpush1.msra.mxu0 0.0
      %491 = vmatprep.subr.mxu0 0.0
      %492 = vmatpush1.msra.mxu0 0.0
      %493 = vmatprep.subr.mxu0 0.0
      %494 = vmatpush1.msra.mxu0 0.0
      %495 = vmatprep.subr.mxu0 0.0
      %496 = vmatpush1.msra.mxu0 0.0
      %497 = vmatprep.subr.mxu0 0.0
      %498 = vmatpush1.msra.mxu0 0.0
      %499 = vmatprep.subr.mxu0 0.0
      %500 = vmatpush1.msra.mxu0 0.0
      %501 = vmatprep.subr.mxu0 0.0
      %502 = vmatpush1.msra.mxu0 0.0
      %503 = vmatprep.subr.mxu0 0.0
      %504 = vmatpush1.msra.mxu0 0.0
      %505 = vmatprep.subr.mxu0 0.0
      %506 = vmatpush1.msra.mxu0 0.0
      %507 = vmatprep.subr.mxu0 0.0
      %508 = vmatpush1.msra.mxu0 0.0
      %509 = vmatprep.subr.mxu0 0.0
      %510 = vmatpush1.msra.mxu0 0.0
      %511 = vmatprep.subr.mxu0 0.0
      %512 = vmatpush1.msra.mxu0 0.0
      %513 = vmatprep.subr.mxu0 0.0
      %514 = vmatpush1.msra.mxu0 0.0
      %515 = vmatprep.subr.mxu0 0.0
      %516 = vmatpush1.msra.mxu0 0.0
      %517 = vmatprep.subr.mxu0 0.0
      %518 = vmatpush1.msra.mxu0 0.0
      %519 = vmatprep.subr.mxu0 0.0
      %520 = vmatpush1.msra.mxu0 0.0
      %521 = vmatprep.subr.mxu0 0.0
      %522 = vmatpush1.msra.mxu0 0.0
      %523 = vmatprep.subr.mxu0 0.0
      %524 = vmatpush1.msra.mxu0 0.0
      %525 = vmatprep.mubr.f32.mxu0 0.0
      %526 = vmatmul.mubr.f32.gmra.mrb[0].mxu0 %v450
      %v527 = vpop.f32.mrb[0].mxu0
      %v528 = vadd.f32 0.0, %v527
      %v529 = vpop.f32.mrb[0].mxu0
      %530 = vmatprep.mubr.f32.mxu0 0.0
      %531 = vmatmul.mubr.f32.gmra.mrb[0].mxu0 %v453
      %v532 = vpop.f32.mrb[0].mxu0
      %v533 = vadd.f32 0.0, %v532
      %v534 = vpop.f32.mrb[0].mxu0
      %535 = vmatprep.mubr.f32.mxu0 0.0
      %536 = vmatmul.mubr.f32.gmra.mrb[0].mxu0 %v456
      %v537 = vpop.f32.mrb[0].mxu0
      %v538 = vadd.f32 0.0, %v537
      %v539 = vpop.f32.mrb[0].mxu0
      %540 = vmatprep.mubr.f32.mxu0 0.0
      %541 = vmatmul.mubr.f32.gmra.mrb[0].mxu0 %v459
      %v542 = vpop.f32.mrb[0].mxu0
      %v543 = vadd.f32 0.0, %v542
      %v544 = vpop.f32.mrb[0].mxu0
      %545 = vdwg.mxu0
      %vm546 = vcmp.gt.f32.partialorder %v528, 1.0
      %vm547 = vcmp.gt.f32.partialorder %v533, 1.0
      %vm548 = vcmp.gt.f32.partialorder %v538, 1.0
      %vm549 = vcmp.gt.f32.partialorder %v543, 1.0
      %v550 = vsel %vm546, 1, 0
      %v551 = vsel %vm547, 1, 0
      %v552 = vsel %vm548, 1, 0
      %v553 = vsel %vm549, 1, 0
      %v554 = vcvt.s32.f32 %v550
      %v555 = vcvt.s32.f32 %v551
      %v556 = vcvt.s32.f32 %v552
      %v557 = vcvt.s32.f32 %v553
      %v558 = vpack.c.bf16 %v555, %v554
      %v559 = vpack.c.bf16 %v557, %v556
      %v562 = vunpack.c.l.b16 %v558
      %v563 = vunpack.c.h.b16 %v558
      %v564 = vunpack.c.l.b16 %v559
      %v565 = vunpack.c.h.b16 %v559
      %v566 = vpack.c.b16 %v562, %v562
      %v567 = vpack.c.b16 %v563, %v563
      %v568 = vpack.c.b16 %v564, %v564
      %v569 = vpack.c.b16 %v565, %v565
      %vm574 = vcmask 60416
      %575 = vst.msk [vmem:[%s423] sm:$0xf] %vm574, %v566
      %576 = vst.msk [vmem:[%s423 + $0x4] sm:$0xf] %vm574, %v567
      %577 = vst.msk [vmem:[%s423 + $0x8] sm:$0xf] %vm574, %v568
      %578 = vst.msk [vmem:[%s423 + $0xc] sm:$0xf] %vm574, %v569
      %v579 = vld [vmem:[%s4] sm:$0xff]
      %v580 = vld [vmem:[%s4 + $0x8] sm:$0xff]
      %v581 = vld [vmem:[%s4 + $0x10] sm:$0xff]
      %v582 = vld [vmem:[%s4 + $0x18] sm:$0xff]
      %v583 = vld [vmem:[%s407] sm:$0xff]
      %v584 = vld [vmem:[%s407 + $0x8] sm:$0xff]
      %v585 = vld [vmem:[%s407 + $0x10] sm:$0xff]
      %v586 = vld [vmem:[%s407 + $0x18] sm:$0xff]
      %v588 = vsel %vm448, %v579, 0
      %v591 = vsel %vm448, %v580, 0
      %v594 = vsel %vm448, %v581, 0
      %v597 = vsel %vm448, %v582, 0
      %599 = vmatprep.subr.mxu0 0.0
      %600 = vmatpush1.msra.mxu0 %v583
      %601 = vmatprep.subr.mxu0 0.0
      %602 = vmatpush1.msra.mxu0 %v584
      %603 = vmatprep.subr.mxu0 0.0
      %604 = vmatpush1.msra.mxu0 %v585
      %605 = vmatprep.subr.mxu0 0.0
      %606 = vmatpush1.msra.mxu0 %v586
      %607 = vmatprep.subr.mxu0 0.0
      %608 = vmatpush1.msra.mxu0 0.0
      %609 = vmatprep.subr.mxu0 0.0
      %610 = vmatpush1.msra.mxu0 0.0
      %611 = vmatprep.subr.mxu0 0.0
      %612 = vmatpush1.msra.mxu0 0.0
      %613 = vmatprep.subr.mxu0 0.0
      %614 = vmatpush1.msra.mxu0 0.0
      %615 = vmatprep.subr.mxu0 0.0
      %616 = vmatpush1.msra.mxu0 0.0
      %617 = vmatprep.subr.mxu0 0.0
      %618 = vmatpush1.msra.mxu0 0.0
      %619 = vmatprep.subr.mxu0 0.0
      %620 = vmatpush1.msra.mxu0 0.0
      %621 = vmatprep.subr.mxu0 0.0
      %622 = vmatpush1.msra.mxu0 0.0
      %623 = vmatprep.subr.mxu0 0.0
      %624 = vmatpush1.msra.mxu0 0.0
      %625 = vmatprep.subr.mxu0 0.0
      %626 = vmatpush1.msra.mxu0 0.0
      %627 = vmatprep.subr.mxu0 0.0
      %628 = vmatpush1.msra.mxu0 0.0
      %629 = vmatprep.subr.mxu0 0.0
      %630 = vmatpush1.msra.mxu0 0.0
      %631 = vmatprep.subr.mxu0 0.0
      %632 = vmatpush1.msra.mxu0 0.0
      %633 = vmatprep.subr.mxu0 0.0
      %634 = vmatpush1.msra.mxu0 0.0
      %635 = vmatprep.subr.mxu0 0.0
      %636 = vmatpush1.msra.mxu0 0.0
      %637 = vmatprep.subr.mxu0 0.0
      %638 = vmatpush1.msra.mxu0 0.0
      %639 = vmatprep.subr.mxu0 0.0
      %640 = vmatpush1.msra.mxu0 0.0
      %641 = vmatprep.subr.mxu0 0.0
      %642 = vmatpush1.msra.mxu0 0.0
      %643 = vmatprep.subr.mxu0 0.0
      %644 = vmatpush1.msra.mxu0 0.0
      %645 = vmatprep.subr.mxu0 0.0
      %646 = vmatpush1.msra.mxu0 0.0
      %647 = vmatprep.subr.mxu0 0.0
      %648 = vmatpush1.msra.mxu0 0.0
      %649 = vmatprep.subr.mxu0 0.0
      %650 = vmatpush1.msra.mxu0 0.0
      %651 = vmatprep.subr.mxu0 0.0
      %652 = vmatpush1.msra.mxu0 0.0
      %653 = vmatprep.subr.mxu0 0.0
      %654 = vmatpush1.msra.mxu0 0.0
      %655 = vmatprep.subr.mxu0 0.0
      %656 = vmatpush1.msra.mxu0 0.0
      %657 = vmatprep.subr.mxu0 0.0
      %658 = vmatpush1.msra.mxu0 0.0
      %659 = vmatprep.subr.mxu0 0.0
      %660 = vmatpush1.msra.mxu0 0.0
      %661 = vmatprep.subr.mxu0 0.0
      %662 = vmatpush1.msra.mxu0 0.0
      %663 = vmatprep.mubr.f32.mxu0 0.0
      %664 = vmatmul.mubr.f32.gmra.mrb[0].mxu0 %v588
      %v665 = vpop.f32.mrb[0].mxu0
      %v666 = vadd.f32 0.0, %v665
      %v667 = vpop.f32.mrb[0].mxu0
      %668 = vmatprep.mubr.f32.mxu0 0.0
      %669 = vmatmul.mubr.f32.gmra.mrb[0].mxu0 %v591
      %v670 = vpop.f32.mrb[0].mxu0
      %v671 = vadd.f32 0.0, %v670
      %v672 = vpop.f32.mrb[0].mxu0
      %673 = vmatprep.mubr.f32.mxu0 0.0
      %674 = vmatmul.mubr.f32.gmra.mrb[0].mxu0 %v594
      %v675 = vpop.f32.mrb[0].mxu0
      %v676 = vadd.f32 0.0, %v675
      %v677 = vpop.f32.mrb[0].mxu0
      %678 = vmatprep.mubr.f32.mxu0 0.0
      %679 = vmatmul.mubr.f32.gmra.mrb[0].mxu0 %v597
      %v680 = vpop.f32.mrb[0].mxu0
      %v681 = vadd.f32 0.0, %v680
      %v682 = vpop.f32.mrb[0].mxu0
      %683 = vdwg.mxu0
      %vm684 = vcmp.gt.f32.partialorder %v666, 1.0
      %vm685 = vcmp.gt.f32.partialorder %v671, 1.0
      %vm686 = vcmp.gt.f32.partialorder %v676, 1.0
      %vm687 = vcmp.gt.f32.partialorder %v681, 1.0
      %v688 = vsel %vm684, 1, 0
      %v689 = vsel %vm685, 1, 0
      %v690 = vsel %vm686, 1, 0
      %v691 = vsel %vm687, 1, 0
      %v692 = vcvt.s32.f32 %v688
      %v693 = vcvt.s32.f32 %v689
      %v694 = vcvt.s32.f32 %v690
      %v695 = vcvt.s32.f32 %v691
      %v696 = vpack.c.bf16 %v693, %v692
      %v697 = vpack.c.bf16 %v695, %v694
      %v700 = vunpack.c.l.b16 %v696
      %v701 = vunpack.c.h.b16 %v696
      %v702 = vunpack.c.l.b16 %v697
      %v703 = vunpack.c.h.b16 %v697
      %v704 = vpack.c.b16 %v700, %v700
      %v705 = vpack.c.b16 %v701, %v701
      %v706 = vpack.c.b16 %v702, %v702
      %v707 = vpack.c.b16 %v703, %v703
      %712 = vst.msk [vmem:[%s431] sm:$0xf] %vm574, %v704
      %713 = vst.msk [vmem:[%s431 + $0x4] sm:$0xf] %vm574, %v705
      %714 = vst.msk [vmem:[%s431 + $0x8] sm:$0xf] %vm574, %v706
      %715 = vst.msk [vmem:[%s431 + $0xc] sm:$0xf] %vm574, %v707
      %v716 = vld [vmem:[%s5] sm:$0xff]
      %v717 = vld [vmem:[%s5 + $0x8] sm:$0xff]
      %v718 = vld [vmem:[%s5 + $0x10] sm:$0xff]
      %v719 = vld [vmem:[%s5 + $0x18] sm:$0xff]
      %v720 = vld [vmem:[%s415] sm:$0xff]
      %v721 = vld [vmem:[%s415 + $0x8] sm:$0xff]
      %v722 = vld [vmem:[%s415 + $0x10] sm:$0xff]
      %v723 = vld [vmem:[%s415 + $0x18] sm:$0xff]
      %v725 = vsel %vm448, %v716, 0
      %v728 = vsel %vm448, %v717, 0
      %v731 = vsel %vm448, %v718, 0
      %v734 = vsel %vm448, %v719, 0
      %736 = vmatprep.subr.mxu0 0.0
      %737 = vmatpush1.msra.mxu0 %v720
      %738 = vmatprep.subr.mxu0 0.0
      %739 = vmatpush1.msra.mxu0 %v721
      %740 = vmatprep.subr.mxu0 0.0
      %741 = vmatpush1.msra.mxu0 %v722
      %742 = vmatprep.subr.mxu0 0.0
      %743 = vmatpush1.msra.mxu0 %v723
      %744 = vmatprep.subr.mxu0 0.0
      %745 = vmatpush1.msra.mxu0 0.0
      %746 = vmatprep.subr.mxu0 0.0
      %747 = vmatpush1.msra.mxu0 0.0
      %748 = vmatprep.subr.mxu0 0.0
      %749 = vmatpush1.msra.mxu0 0.0
      %750 = vmatprep.subr.mxu0 0.0
      %751 = vmatpush1.msra.mxu0 0.0
      %752 = vmatprep.subr.mxu0 0.0
      %753 = vmatpush1.msra.mxu0 0.0
      %754 = vmatprep.subr.mxu0 0.0
      %755 = vmatpush1.msra.mxu0 0.0
      %756 = vmatprep.subr.mxu0 0.0
      %757 = vmatpush1.msra.mxu0 0.0
      %758 = vmatprep.subr.mxu0 0.0
      %759 = vmatpush1.msra.mxu0 0.0
      %760 = vmatprep.subr.mxu0 0.0
      %761 = vmatpush1.msra.mxu0 0.0
      %762 = vmatprep.subr.mxu0 0.0
      %763 = vmatpush1.msra.mxu0 0.0
      %764 = vmatprep.subr.mxu0 0.0
      %765 = vmatpush1.msra.mxu0 0.0
      %766 = vmatprep.subr.mxu0 0.0
      %767 = vmatpush1.msra.mxu0 0.0
      %768 = vmatprep.subr.mxu0 0.0
      %769 = vmatpush1.msra.mxu0 0.0
      %770 = vmatprep.subr.mxu0 0.0
      %771 = vmatpush1.msra.mxu0 0.0
      %772 = vmatprep.subr.mxu0 0.0
      %773 = vmatpush1.msra.mxu0 0.0
      %774 = vmatprep.subr.mxu0 0.0
      %775 = vmatpush1.msra.mxu0 0.0
      %776 = vmatprep.subr.mxu0 0.0
      %777 = vmatpush1.msra.mxu0 0.0
      %778 = vmatprep.subr.mxu0 0.0
      %779 = vmatpush1.msra.mxu0 0.0
      %780 = vmatprep.subr.mxu0 0.0
      %781 = vmatpush1.msra.mxu0 0.0
      %782 = vmatprep.subr.mxu0 0.0
      %783 = vmatpush1.msra.mxu0 0.0
      %784 = vmatprep.subr.mxu0 0.0
      %785 = vmatpush1.msra.mxu0 0.0
      %786 = vmatprep.subr.mxu0 0.0
      %787 = vmatpush1.msra.mxu0 0.0
      %788 = vmatprep.subr.mxu0 0.0
      %789 = vmatpush1.msra.mxu0 0.0
      %790 = vmatprep.subr.mxu0 0.0
      %791 = vmatpush1.msra.mxu0 0.0
      %792 = vmatprep.subr.mxu0 0.0
      %793 = vmatpush1.msra.mxu0 0.0
      %794 = vmatprep.subr.mxu0 0.0
      %795 = vmatpush1.msra.mxu0 0.0
      %796 = vmatprep.subr.mxu0 0.0
      %797 = vmatpush1.msra.mxu0 0.0
      %798 = vmatprep.subr.mxu0 0.0
      %799 = vmatpush1.msra.mxu0 0.0
      %800 = vmatprep.mubr.f32.mxu0 0.0
      %801 = vmatmul.mubr.f32.gmra.mrb[0].mxu0 %v725
      %v802 = vpop.f32.mrb[0].mxu0
      %v803 = vadd.f32 0.0, %v802
      %v804 = vpop.f32.mrb[0].mxu0
      %805 = vmatprep.mubr.f32.mxu0 0.0
      %806 = vmatmul.mubr.f32.gmra.mrb[0].mxu0 %v728
      %v807 = vpop.f32.mrb[0].mxu0
      %v808 = vadd.f32 0.0, %v807
      %v809 = vpop.f32.mrb[0].mxu0
      %810 = vmatprep.mubr.f32.mxu0 0.0
      %811 = vmatmul.mubr.f32.gmra.mrb[0].mxu0 %v731
      %v812 = vpop.f32.mrb[0].mxu0
      %v813 = vadd.f32 0.0, %v812
      %v814 = vpop.f32.mrb[0].mxu0
      %815 = vmatprep.mubr.f32.mxu0 0.0
      %816 = vmatmul.mubr.f32.gmra.mrb[0].mxu0 %v734
      %v817 = vpop.f32.mrb[0].mxu0
      %v818 = vadd.f32 0.0, %v817
      %v819 = vpop.f32.mrb[0].mxu0
      %820 = vdwg.mxu0
      %vm821 = vcmp.gt.f32.partialorder %v803, 1.0
      %vm822 = vcmp.gt.f32.partialorder %v808, 1.0
      %vm823 = vcmp.gt.f32.partialorder %v813, 1.0
      %vm824 = vcmp.gt.f32.partialorder %v818, 1.0
      %v825 = vsel %vm821, 1, 0
      %v826 = vsel %vm822, 1, 0
      %v827 = vsel %vm823, 1, 0
      %v828 = vsel %vm824, 1, 0
      %v829 = vcvt.s32.f32 %v825
      %v830 = vcvt.s32.f32 %v826
      %v831 = vcvt.s32.f32 %v827
      %v832 = vcvt.s32.f32 %v828
      %v833 = vpack.c.bf16 %v830, %v829
      %v834 = vpack.c.bf16 %v832, %v831
      %v837 = vunpack.c.l.b16 %v833
      %v838 = vunpack.c.h.b16 %v833
      %v839 = vunpack.c.l.b16 %v834
      %v840 = vunpack.c.h.b16 %v834
      %v841 = vpack.c.b16 %v837, %v837
      %v842 = vpack.c.b16 %v838, %v838
      %v843 = vpack.c.b16 %v839, %v839
      %v844 = vpack.c.b16 %v840, %v840
      %849 = vst.msk [vmem:[%s439] sm:$0xf] %vm574, %v841
      %850 = vst.msk [vmem:[%s439 + $0x4] sm:$0xf] %vm574, %v842
      %851 = vst.msk [vmem:[%s439 + $0x8] sm:$0xf] %vm574, %v843
      %852 = vst.msk [vmem:[%s439 + $0xc] sm:$0xf] %vm574, %v844
      %p853 = scmp.lt.s32.totalorder %s24, 1
      %s854 = scalar_select %p853, %s24, 1
      %p855 = scmp.lt.s32.totalorder %s25, 0
      %s856 = scalar_select %p855, %s25, 0
      %s857 = smul.addr %s854, 4
      %s858 = sadd.s32 %s856, %s857
      %s859 = smul.addr %s858, 4
      %s860 = scalar_lea.vmem %s6, %s859
      %p861 = scmp.lt.s32.totalorder %s24, 1
      %s862 = scalar_select %p861, %s24, 1
      %p863 = scmp.lt.s32.totalorder %s25, 0
      %s864 = scalar_select %p863, %s25, 0
      %s865 = smul.addr %s862, 4
      %s866 = sadd.s32 %s864, %s865
      %s867 = smul.addr %s866, 4
      %s868 = scalar_lea.vmem %s7, %s867
      %p869 = scmp.lt.s32.totalorder %s24, 1
      %s870 = scalar_select %p869, %s24, 1
      %p871 = scmp.lt.s32.totalorder %s25, 0
      %s872 = scalar_select %p871, %s25, 0
      %s873 = smul.addr %s870, 4
      %s874 = sadd.s32 %s872, %s873
      %s875 = smul.addr %s874, 4
      %s876 = scalar_lea.vmem %s8, %s875
      // Predicated region
      $region45: #{ssa_forward.3} parent=43 // pred_check
        %p877 = pneg %p199
      $region46: #{ssa_forward.3} parent=43 // pred_check_branch
        %879 = sbr.rel (%p877) target = $region48
      $region47: #{ssa_forward.3} parent=43 // pred_region
        _
      $region48: #{ssa_forward.3} parent=43 // pred_fallthru
        _
      // Predicated region
      $region49: #{ssa_forward.3} parent=43 // pred_check
        %p880 = pneg %p227
      $region50: #{ssa_forward.3} parent=43 // pred_check_branch
        %882 = sbr.rel (%p880) target = $region52
      $region51: #{ssa_forward.3} parent=43 // pred_region
        _
      $region52: #{ssa_forward.3} parent=43 // pred_fallthru
        _
      // Predicated region
      $region53: #{ssa_forward.3} parent=43 // pred_check
        %p883 = pneg %p255
      $region54: #{ssa_forward.3} parent=43 // pred_check_branch
        %885 = sbr.rel (%p883) target = $region56
      $region55: #{ssa_forward.3} parent=43 // pred_region
        _
      $region56: #{ssa_forward.3} parent=43 // pred_fallthru
        _
    $region44: #{ssa_forward.3} parent=5 // pred_fallthru
      _
    %p886 = scmp.le.s32.totalorder 2, %s15
    // Predicated region
    $region57: #{ssa_forward.3} parent=5 // pred_check
      %p887 = pneg %p886
    $region58: #{ssa_forward.3} parent=5 // pred_check_branch
      %889 = sbr.rel (%p887) target = $region60
    $region59: #{ssa_forward.3} parent=5 // pred_region
      %s890 = ssub.s32 %s15, 2
      // Predicated region
      $region61: #{ssa_forward.3} parent=59 // pred_check
        %p891 = pneg %p205
      $region62: #{ssa_forward.3} parent=59 // pred_check_branch
        %893 = sbr.rel (%p891) target = $region64
      $region63: #{ssa_forward.3} parent=59 // pred_region
        %p894 = scmp.lt.s32.totalorder %s26, 1
        %s895 = scalar_select %p894, %s26, 1
        %p896 = scmp.lt.s32.totalorder %s27, 0
        %s897 = scalar_select %p896, %s27, 0
        %s898 = smul.addr %s895, 4
        %s899 = sadd.s32 %s897, %s898
        %s900 = smul.addr %s899, 4
        %s901 = scalar_lea.vmem %s6, %s900
      $region64: #{ssa_forward.3} parent=59 // pred_fallthru
        _
      // Predicated region
      $region65: #{ssa_forward.3} parent=59 // pred_check
        %p902 = pneg %p233
      $region66: #{ssa_forward.3} parent=59 // pred_check_branch
        %904 = sbr.rel (%p902) target = $region68
      $region67: #{ssa_forward.3} parent=59 // pred_region
        %p905 = scmp.lt.s32.totalorder %s26, 1
        %s906 = scalar_select %p905, %s26, 1
        %p907 = scmp.lt.s32.totalorder %s27, 0
        %s908 = scalar_select %p907, %s27, 0
        %s909 = smul.addr %s906, 4
        %s910 = sadd.s32 %s908, %s909
        %s911 = smul.addr %s910, 4
        %s912 = scalar_lea.vmem %s7, %s911
      $region68: #{ssa_forward.3} parent=59 // pred_fallthru
        _
      // Predicated region
      $region69: #{ssa_forward.3} parent=59 // pred_check
        %p913 = pneg %p261
      $region70: #{ssa_forward.3} parent=59 // pred_check_branch
        %915 = sbr.rel (%p913) target = $region72
      $region71: #{ssa_forward.3} parent=59 // pred_region
        %p916 = scmp.lt.s32.totalorder %s26, 1
        %s917 = scalar_select %p916, %s26, 1
        %p918 = scmp.lt.s32.totalorder %s27, 0
        %s919 = scalar_select %p918, %s27, 0
        %s920 = smul.addr %s917, 4
        %s921 = sadd.s32 %s919, %s920
        %s922 = smul.addr %s921, 4
        %s923 = scalar_lea.vmem %s8, %s922
      $region72: #{ssa_forward.3} parent=59 // pred_fallthru
        _
    $region60: #{ssa_forward.3} parent=5 // pred_fallthru
      _
  $region6: #{ssa_forward.3} parent=0 // loop_footer
    %s19 = sadd.s32 1, %s15
  $region7: #{ssa_forward.3} parent=0 // loop_footer_branch
    %14 = sbr.rel target = $region3
  $region8: #{ssa_forward.3} parent=0 // loop_exit
    _

// kernel: ssa_forward.5
$region0: #{ssa_forward.5}
  #allocation0 [shape = 'u32[]', space=smem, size = 0x4, offset = 0x4, fixed_abs, tag = 'smem constant byte address 0x4 - core index']
  #allocation1 [shape = 'u32[144,128]{1,0:T(1,128)}', space=vmem, size = 0x12000, scoped, tag = 'internal scratch']
  %s0 = inlined_call_operand.vmem [shape: f32[2,32,8], index: 0, kind: input, shape index: {}]
  %s1 = inlined_call_operand.vmem [shape: f32[32,32], index: 1, kind: input, shape index: {}]
  %s2 = inlined_call_operand.vmem [shape: f32[32,1], index: 2, kind: input, shape index: {}]
  %s3 = inlined_call_operand.vmem [shape: f32[2,32,8], index: 3, kind: output, shape index: {0}]
  %s4 = inlined_call_operand.vmem [shape: f32[2,32,8], index: 4, kind: output, shape index: {1}]
  %5 = xla_tuple %s3, %s4
  %s6 = sld [smem:[#allocation0]]
  $region53: #{ssa_forward.5} parent=0
    _
  %s8 = ssub.s32 1, %s6
  %s9 = scalar_select 0, %s8, %s6
  loop: start=0, step=1, limit=4
  $region2: #{ssa_forward.5} parent=0 // loop_pre_header
    _
  $region3: #{ssa_forward.5} parent=0 // loop_header
    %s11 = sphi 0, %s15
    %p12 = scmp.ge.s32.totalorder %s11, 4
    %s18 = sphi 0, %s30
    %s19 = sphi 0, %s26
    %s20 = sphi 0, %s18
    %s21 = sphi 0, %s19
    %s22 = sphi 0, %s20
    %s23 = sphi 0, %s21
    %s35 = sphi 0, %s37
    %s38 = sphi 0, %s35
    %s39 = sphi 0, %s38
    %s55 = sphi 0, %s39
    %s59 = sphi 0, %s59
    %s61 = sphi 0, %s59
    %s62 = sphi 0, %s61
    %s76 = sphi 0, %s62
    %s80 = sphi 0, %s80
    %s82 = sphi 0, %s80
    %s83 = sphi 0, %s82
    %s97 = sphi 0, %s83
    %s105 = sphi 0, %s107
    %s108 = sphi 0, %s105
    %s109 = sphi 0, %s108
    %s125 = sphi 0, %s109
    %s133 = sphi 0, %s135
    %s136 = sphi 0, %s133
    %s137 = sphi 0, %s136
    %s153 = sphi 0, %s137
  $region4: #{ssa_forward.5} parent=0 // loop_header_branch
    %14 = sbr.rel (%p12) target = $region8
  $region5: #{ssa_forward.5} parent=0 // loop_body
    %s16 = ssub.s32 %s11, 1
    %s17 = ssub.s32 %s11, 2
    %s24 = sadd.s32 1, %s19
    %p25 = scmp.ge.s32.totalorder %s24, 1
    %s26 = scalar_select %p25, 0, %s24
    %s27 = sadd.s32 1, %s18
    %s28 = scalar_select %p25, %s27, %s18
    %p29 = scmp.ge.s32.totalorder %s28, 2
    %s30 = scalar_select %p29, 0, %s28
    %s31 = ssub.s32 %s18, %s30
    %s32 = ssub.s32 %s19, %s26
    %s33 = sor.u32 %s31, %s32
    %p34 = scmp.eq.s32.totalorder %s33, 0
    %s36 = sadd.s32 %s35, 1
    %s37 = scalar_select %p34, %s35, %s36
    %p40 = pneg %p34
    %p41 = scmp.eq.s32.totalorder %s11, 1
    %p42 = por %p40, %p41
    %p43 = scmp.ne.s32.totalorder %s35, %s38
    %p44 = scmp.eq.s32.totalorder %s11, 0
    %p45 = por %p43, %p44
    %p46 = scmp.ne.s32.totalorder %s35, %s38
    %p47 = scmp.eq.s32.totalorder %s16, 1
    %p48 = por %p46, %p47
    %p49 = scmp.ne.s32.totalorder %s38, %s39
    %p50 = scmp.eq.s32.totalorder %s16, 0
    %p51 = por %p49, %p50
    %p52 = scmp.ne.s32.totalorder %s38, %s39
    %p53 = scmp.eq.s32.totalorder %s17, 1
    %p54 = por %p52, %p53
    %p56 = scmp.ne.s32.totalorder %s39, %s55
    %p57 = scmp.eq.s32.totalorder %s17, 0
    %p58 = por %p56, %p57
    %s60 = sadd.s32 %s59, 1
    %p63 = scmp.eq.s32.totalorder %s11, 1
    %p64 = scmp.ne.s32.totalorder %s59, %s61
    %p65 = scmp.eq.s32.totalorder %s11, 0
    %p66 = por %p64, %p65
    %p67 = scmp.ne.s32.totalorder %s59, %s61
    %p68 = scmp.eq.s32.totalorder %s16, 1
    %p69 = por %p67, %p68
    %p70 = scmp.ne.s32.totalorder %s61, %s62
    %p71 = scmp.eq.s32.totalorder %s16, 0
    %p72 = por %p70, %p71
    %p73 = scmp.ne.s32.totalorder %s61, %s62
    %p74 = scmp.eq.s32.totalorder %s17, 1
    %p75 = por %p73, %p74
    %p77 = scmp.ne.s32.totalorder %s62, %s76
    %p78 = scmp.eq.s32.totalorder %s17, 0
    %p79 = por %p77, %p78
    %s81 = sadd.s32 %s80, 1
    %p84 = scmp.eq.s32.totalorder %s11, 1
    %p85 = scmp.ne.s32.totalorder %s80, %s82
    %p86 = scmp.eq.s32.totalorder %s11, 0
    %p87 = por %p85, %p86
    %p88 = scmp.ne.s32.totalorder %s80, %s82
    %p89 = scmp.eq.s32.totalorder %s16, 1
    %p90 = por %p88, %p89
    %p91 = scmp.ne.s32.totalorder %s82, %s83
    %p92 = scmp.eq.s32.totalorder %s16, 0
    %p93 = por %p91, %p92
    %p94 = scmp.ne.s32.totalorder %s82, %s83
    %p95 = scmp.eq.s32.totalorder %s17, 1
    %p96 = por %p94, %p95
    %p98 = scmp.ne.s32.totalorder %s83, %s97
    %p99 = scmp.eq.s32.totalorder %s17, 0
    %p100 = por %p98, %p99
    %s101 = ssub.s32 %s18, %s30
    %s102 = ssub.s32 %s19, %s26
    %s103 = sor.u32 %s101, %s102
    %p104 = scmp.eq.s32.totalorder %s103, 0
    %s106 = sadd.s32 %s105, 1
    %s107 = scalar_select %p104, %s105, %s106
    %p110 = pneg %p104
    %p111 = scmp.eq.s32.totalorder %s11, 1
    %p112 = por %p110, %p111
    %p113 = scmp.ne.s32.totalorder %s105, %s108
    %p114 = scmp.eq.s32.totalorder %s11, 0
    %p115 = por %p113, %p114
    %p116 = scmp.ne.s32.totalorder %s105, %s108
    %p117 = scmp.eq.s32.totalorder %s16, 1
    %p118 = por %p116, %p117
    %p119 = scmp.ne.s32.totalorder %s108, %s109
    %p120 = scmp.eq.s32.totalorder %s16, 0
    %p121 = por %p119, %p120
    %p122 = scmp.ne.s32.totalorder %s108, %s109
    %p123 = scmp.eq.s32.totalorder %s17, 1
    %p124 = por %p122, %p123
    %p126 = scmp.ne.s32.totalorder %s109, %s125
    %p127 = scmp.eq.s32.totalorder %s17, 0
    %p128 = por %p126, %p127
    %s129 = ssub.s32 %s18, %s30
    %s130 = ssub.s32 %s19, %s26
    %s131 = sor.u32 %s129, %s130
    %p132 = scmp.eq.s32.totalorder %s131, 0
    %s134 = sadd.s32 %s133, 1
    %s135 = scalar_select %p132, %s133, %s134
    %p138 = pneg %p132
    %p139 = scmp.eq.s32.totalorder %s11, 1
    %p140 = por %p138, %p139
    %p141 = scmp.ne.s32.totalorder %s133, %s136
    %p142 = scmp.eq.s32.totalorder %s11, 0
    %p143 = por %p141, %p142
    %p144 = scmp.ne.s32.totalorder %s133, %s136
    %p145 = scmp.eq.s32.totalorder %s16, 1
    %p146 = por %p144, %p145
    %p147 = scmp.ne.s32.totalorder %s136, %s137
    %p148 = scmp.eq.s32.totalorder %s16, 0
    %p149 = por %p147, %p148
    %p150 = scmp.ne.s32.totalorder %s136, %s137
    %p151 = scmp.eq.s32.totalorder %s17, 1
    %p152 = por %p150, %p151
    %p154 = scmp.ne.s32.totalorder %s137, %s153
    %p155 = scmp.eq.s32.totalorder %s17, 0
    %p156 = por %p154, %p155
    %p157 = scmp.le.s32.totalorder 1, %s11
    %p158 = scmp.lt.s32.totalorder %s11, 3
    %p159 = pnand %p157, %p158
    %p160 = pneg %p159
    // Predicated region
    $region9: #{ssa_forward.5} parent=5 // pred_check
      _
    $region10: #{ssa_forward.5} parent=5 // pred_check_branch
      %162 = sbr.rel (%p159) target = $region12
    $region11: #{ssa_forward.5} parent=5 // pred_region
      %s163 = ssub.s32 %s11, 1
      // Predicated region
      $region13: #{ssa_forward.5} parent=11 // pred_check
        %p164 = pneg %p72
      $region14: #{ssa_forward.5} parent=11 // pred_check_branch
        %166 = sbr.rel (%p164) target = $region16
      $region15: #{ssa_forward.5} parent=11 // pred_region
        _
      $region16: #{ssa_forward.5} parent=11 // pred_fallthru
        _
      // Predicated region
      $region17: #{ssa_forward.5} parent=11 // pred_check
        %p167 = pneg %p93
      $region18: #{ssa_forward.5} parent=11 // pred_check_branch
        %169 = sbr.rel (%p167) target = $region20
      $region19: #{ssa_forward.5} parent=11 // pred_region
        _
      $region20: #{ssa_forward.5} parent=11 // pred_fallthru
        _
    $region12: #{ssa_forward.5} parent=5 // pred_fallthru
      _
    %p170 = scmp.lt.s32.totalorder %s11, 2
    // Predicated region
    $region21: #{ssa_forward.5} parent=5 // pred_check
      %p171 = pneg %p170
    $region22: #{ssa_forward.5} parent=5 // pred_check_branch
      %173 = sbr.rel (%p171) target = $region24
    $region23: #{ssa_forward.5} parent=5 // pred_region
      // Predicated region
      $region25: #{ssa_forward.5} parent=23 // pred_check
        %p174 = pneg %p45
      $region26: #{ssa_forward.5} parent=23 // pred_check_branch
        %176 = sbr.rel (%p174) target = $region28
      $region27: #{ssa_forward.5} parent=23 // pred_region
        %p177 = scmp.lt.s32.totalorder %s18, 1
        %s178 = scalar_select %p177, %s18, 1
        %p179 = scmp.lt.s32.totalorder %s19, 0
        %s180 = scalar_select %p179, %s19, 0
        %s181 = smul.addr %s178, 4
        %s182 = sadd.s32 %s180, %s181
        %s183 = smul.addr %s182, 8
        %s184 = scalar_lea.vmem %s0, %s183
      $region28: #{ssa_forward.5} parent=23 // pred_fallthru
        _
    $region24: #{ssa_forward.5} parent=5 // pred_fallthru
      _
    %p185 = scmp.le.s32.totalorder 1, %s11
    %p186 = scmp.lt.s32.totalorder %s11, 3
    %p187 = pnand %p185, %p186
    %p188 = pneg %p187
    // Predicated region
    $region29: #{ssa_forward.5} parent=5 // pred_check
      _
    $region30: #{ssa_forward.5} parent=5 // pred_check_branch
      %190 = sbr.rel (%p187) target = $region32
    $region31: #{ssa_forward.5} parent=5 // pred_region
      %s191 = ssub.s32 %s11, 1
      %p192 = scmp.lt.s32.totalorder %s20, 1
      %s193 = scalar_select %p192, %s20, 1
      %p194 = scmp.lt.s32.totalorder %s21, 0
      %s195 = scalar_select %p194, %s21, 0
      %s196 = smul.addr %s193, 4
      %s197 = sadd.s32 %s195, %s196
      %s198 = smul.addr %s197, 8
      %s199 = scalar_lea.vmem %s0, %s198
      %p200 = pneg %p51
      %p201 = pneg %p48
      %p202 = pneg %p72
      %p203 = pneg %p69
      %p204 = pneg %p93
      %p205 = pneg %p90
      %p206 = pneg %p121
      %p207 = pneg %p118
      %p208 = scmp.lt.s32.totalorder %s20, 1
      %s209 = scalar_select %p208, %s20, 1
      %p210 = scmp.lt.s32.totalorder %s21, 0
      %s211 = scalar_select %p210, %s21, 0
      %s212 = smul.addr %s209, 4
      %s213 = sadd.s32 %s211, %s212
      %s214 = smul.addr %s213, 8
      %s215 = scalar_lea.vmem %s3, %s214
      %p216 = pneg %p149
      %p217 = pneg %p146
      %p218 = scmp.lt.s32.totalorder %s20, 1
      %s219 = scalar_select %p218, %s20, 1
      %p220 = scmp.lt.s32.totalorder %s21, 0
      %s221 = scalar_select %p220, %s21, 0
      %s222 = smul.addr %s219, 4
      %s223 = sadd.s32 %s221, %s222
      %s224 = smul.addr %s223, 8
      %s225 = scalar_lea.vmem %s4, %s224
      %p226 = scmp.lt.s32.totalorder %s20, 1
      %s227 = scalar_select %p226, %s20, 1
      %p228 = scmp.lt.s32.totalorder %s21, 0
      %s229 = scalar_select %p228, %s21, 0
      %s230 = smul.addr %s227, 4
      %s231 = sadd.s32 %s229, %s230
      %s232 = smul.addr %s231, 8
      %s233 = scalar_lea.vmem %s0, %s232
      %p234 = scmp.lt.s32.totalorder %s20, 1
      %s235 = scalar_select %p234, %s20, 1
      %p236 = scmp.lt.s32.totalorder %s21, 0
      %s237 = scalar_select %p236, %s21, 0
      %s238 = smul.addr %s235, 4
      %s239 = sadd.s32 %s237, %s238
      %s240 = smul.addr %s239, 8
      %s241 = scalar_lea.vmem %s3, %s240
      %p242 = scmp.lt.s32.totalorder %s20, 1
      %s243 = scalar_select %p242, %s20, 1
      %p244 = scmp.lt.s32.totalorder %s21, 0
      %s245 = scalar_select %p244, %s21, 0
      %s246 = smul.addr %s243, 4
      %s247 = sadd.s32 %s245, %s246
      %s248 = smul.addr %s247, 8
      %s249 = scalar_lea.vmem %s4, %s248
      %v250 = vld [vmem:[%s1] sm:$0xff]
      %v251 = vld [vmem:[%s1 + $0x8] sm:$0xff]
      %v252 = vld [vmem:[%s1 + $0x10] sm:$0xff]
      %v253 = vld [vmem:[%s1 + $0x18] sm:$0xff]
      %v254 = vld [vmem:[%s233] sm:$0xff]
      %v255 = vld [vmem:[%s233 + $0x8] sm:$0xff]
      %v256 = vld [vmem:[%s233 + $0x10] sm:$0xff]
      %v257 = vld [vmem:[%s233 + $0x18] sm:$0xff]
      %v258 = vld [vmem:[%s2] sm:$0xff]
      %v259 = vld [vmem:[%s2 + $0x8] sm:$0xff]
      %v260 = vld [vmem:[%s2 + $0x10] sm:$0xff]
      %v261 = vld [vmem:[%s2 + $0x18] sm:$0xff]
      %263 = vset.pattern.permute.xlu0 0
      %264 = vperm.xlu0 %263, %v258
      %v265 = vpop.permute.xlu0 %264
      %268 = vset.pattern.permute.xlu0 0
      %269 = vperm.xlu0 %268, %v259
      %v270 = vpop.permute.xlu0 %269
      %273 = vset.pattern.permute.xlu0 0
      %274 = vperm.xlu0 %273, %v260
      %v275 = vpop.permute.xlu0 %274
      %278 = vset.pattern.permute.xlu0 0
      %279 = vperm.xlu0 %278, %v261
      %v280 = vpop.permute.xlu0 %279
      %vm282 = vcmask 261120
      %v284 = vsel %vm282, %v250, 0
      %v287 = vsel %vm282, %v251, 0
      %v290 = vsel %vm282, %v252, 0
      %v293 = vsel %vm282, %v253, 0
      %295 = vmatprep.subr.mxu0 0.0
      %296 = vmatpush1.msra.mxu0 %v254
      %297 = vmatprep.subr.mxu0 0.0
      %298 = vmatpush1.msra.mxu0 %v255
      %299 = vmatprep.subr.mxu0 0.0
      %300 = vmatpush1.msra.mxu0 %v256
      %301 = vmatprep.subr.mxu0 0.0
      %302 = vmatpush1.msra.mxu0 %v257
      %303 = vmatprep.subr.mxu0 0.0
      %304 = vmatpush1.msra.mxu0 0.0
      %305 = vmatprep.subr.mxu0 0.0
      %306 = vmatpush1.msra.mxu0 0.0
      %307 = vmatprep.subr.mxu0 0.0
      %308 = vmatpush1.msra.mxu0 0.0
      %309 = vmatprep.subr.mxu0 0.0
      %310 = vmatpush1.msra.mxu0 0.0
      %311 = vmatprep.subr.mxu0 0.0
      %312 = vmatpush1.msra.mxu0 0.0
      %313 = vmatprep.subr.mxu0 0.0
      %314 = vmatpush1.msra.mxu0 0.0
      %315 = vmatprep.subr.mxu0 0.0
      %316 = vmatpush1.msra.mxu0 0.0
      %317 = vmatprep.subr.mxu0 0.0
      %318 = vmatpush1.msra.mxu0 0.0
      %319 = vmatprep.subr.mxu0 0.0
      %320 = vmatpush1.msra.mxu0 0.0
      %321 = vmatprep.subr.mxu0 0.0
      %322 = vmatpush1.msra.mxu0 0.0
      %323 = vmatprep.subr.mxu0 0.0
      %324 = vmatpush1.msra.mxu0 0.0
      %325 = vmatprep.subr.mxu0 0.0
      %326 = vmatpush1.msra.mxu0 0.0
      %327 = vmatprep.subr.mxu0 0.0
      %328 = vmatpush1.msra.mxu0 0.0
      %329 = vmatprep.subr.mxu0 0.0
      %330 = vmatpush1.msra.mxu0 0.0
      %331 = vmatprep.subr.mxu0 0.0
      %332 = vmatpush1.msra.mxu0 0.0
      %333 = vmatprep.subr.mxu0 0.0
      %334 = vmatpush1.msra.mxu0 0.0
      %335 = vmatprep.subr.mxu0 0.0
      %336 = vmatpush1.msra.mxu0 0.0
      %337 = vmatprep.subr.mxu0 0.0
      %338 = vmatpush1.msra.mxu0 0.0
      %339 = vmatprep.subr.mxu0 0.0
      %340 = vmatpush1.msra.mxu0 0.0
      %341 = vmatprep.subr.mxu0 0.0
      %342 = vmatpush1.msra.mxu0 0.0
      %343 = vmatprep.subr.mxu0 0.0
      %344 = vmatpush1.msra.mxu0 0.0
      %345 = vmatprep.subr.mxu0 0.0
      %346 = vmatpush1.msra.mxu0 0.0
      %347 = vmatprep.subr.mxu0 0.0
      %348 = vmatpush1.msra.mxu0 0.0
      %349 = vmatprep.subr.mxu0 0.0
      %350 = vmatpush1.msra.mxu0 0.0
      %351 = vmatprep.subr.mxu0 0.0
      %352 = vmatpush1.msra.mxu0 0.0
      %353 = vmatprep.subr.mxu0 0.0
      %354 = vmatpush1.msra.mxu0 0.0
      %355 = vmatprep.subr.mxu0 0.0
      %356 = vmatpush1.msra.mxu0 0.0
      %357 = vmatprep.subr.mxu0 0.0
      %358 = vmatpush1.msra.mxu0 0.0
      %359 = vmatprep.mubr.f32.mxu0 0.0
      %360 = vmatmul.mubr.f32.gmra.mrb[0].mxu0 %v284
      %v361 = vpop.f32.mrb[0].mxu0
      %v362 = vadd.f32 %v265, %v361
      %v363 = vpop.f32.mrb[0].mxu0
      %364 = vmatprep.mubr.f32.mxu0 0.0
      %365 = vmatmul.mubr.f32.gmra.mrb[0].mxu0 %v287
      %v366 = vpop.f32.mrb[0].mxu0
      %v367 = vadd.f32 %v270, %v366
      %v368 = vpop.f32.mrb[0].mxu0
      %369 = vmatprep.mubr.f32.mxu0 0.0
      %370 = vmatmul.mubr.f32.gmra.mrb[0].mxu0 %v290
      %v371 = vpop.f32.mrb[0].mxu0
      %v372 = vadd.f32 %v275, %v371
      %v373 = vpop.f32.mrb[0].mxu0
      %374 = vmatprep.mubr.f32.mxu0 0.0
      %375 = vmatmul.mubr.f32.gmra.mrb[0].mxu0 %v293
      %v376 = vpop.f32.mrb[0].mxu0
      %v377 = vadd.f32 %v280, %v376
      %v378 = vpop.f32.mrb[0].mxu0
      %379 = vdwg.mxu0
      %vm380 = vcmask 64512
      %381 = vst.msk [vmem:[%s249] sm:$0xff] %vm380, %v362
      %382 = vst.msk [vmem:[%s249 + $0x8] sm:$0xff] %vm380, %v367
      %383 = vst.msk [vmem:[%s249 + $0x10] sm:$0xff] %vm380, %v372
      %384 = vst.msk [vmem:[%s249 + $0x18] sm:$0xff] %vm380, %v377
      %vm385 = vcmp.gt.f32.partialorder %v362, 0.5
      %vm386 = vcmp.gt.f32.partialorder %v367, 0.5
      %vm387 = vcmp.gt.f32.partialorder %v372, 0.5
      %vm388 = vcmp.gt.f32.partialorder %v377, 0.5
      %v389 = vsel %vm385, 1, 0
      %v390 = vsel %vm386, 1, 0
      %v391 = vsel %vm387, 1, 0
      %v392 = vsel %vm388, 1, 0
      %v393 = vcvt.s32.f32 %v389
      %v394 = vcvt.s32.f32 %v390
      %v395 = vcvt.s32.f32 %v391
      %v396 = vcvt.s32.f32 %v392
      %397 = vst.msk [vmem:[%s241] sm:$0xff] %vm380, %v393
      %398 = vst.msk [vmem:[%s241 + $0x8] sm:$0xff] %vm380, %v394
      %399 = vst.msk [vmem:[%s241 + $0x10] sm:$0xff] %vm380, %v395
      %400 = vst.msk [vmem:[%s241 + $0x18] sm:$0xff] %vm380, %v396
      %p401 = scmp.lt.s32.totalorder %s20, 1
      %s402 = scalar_select %p401, %s20, 1
      %p403 = scmp.lt.s32.totalorder %s21, 0
      %s404 = scalar_select %p403, %s21, 0
      %s405 = smul.addr %s402, 4
      %s406 = sadd.s32 %s404, %s405
      %s407 = smul.addr %s406, 8
      %s408 = scalar_lea.vmem %s3, %s407
      %p409 = scmp.lt.s32.totalorder %s20, 1
      %s410 = scalar_select %p409, %s20, 1
      %p411 = scmp.lt.s32.totalorder %s21, 0
      %s412 = scalar_select %p411, %s21, 0
      %s413 = smul.addr %s410, 4
      %s414 = sadd.s32 %s412, %s413
      %s415 = smul.addr %s414, 8
      %s416 = scalar_lea.vmem %s4, %s415
      // Predicated region
      $region33: #{ssa_forward.5} parent=31 // pred_check
        %p417 = pneg %p118
      $region34: #{ssa_forward.5} parent=31 // pred_check_branch
        %419 = sbr.rel (%p417) target = $region36
      $region35: #{ssa_forward.5} parent=31 // pred_region
        _
      $region36: #{ssa_forward.5} parent=31 // pred_fallthru
        _
      // Predicated region
      $region37: #{ssa_forward.5} parent=31 // pred_check
        %p420 = pneg %p146
      $region38: #{ssa_forward.5} parent=31 // pred_check_branch
        %422 = sbr.rel (%p420) target = $region40
      $region39: #{ssa_forward.5} parent=31 // pred_region
        _
      $region40: #{ssa_forward.5} parent=31 // pred_fallthru
        _
    $region32: #{ssa_forward.5} parent=5 // pred_fallthru
      _
    %p423 = scmp.le.s32.totalorder 2, %s11
    // Predicated region
    $region41: #{ssa_forward.5} parent=5 // pred_check
      %p424 = pneg %p423
    $region42: #{ssa_forward.5} parent=5 // pred_check_branch
      %426 = sbr.rel (%p424) target = $region44
    $region43: #{ssa_forward.5} parent=5 // pred_region
      %s427 = ssub.s32 %s11, 2
      // Predicated region
      $region45: #{ssa_forward.5} parent=43 // pred_check
        %p428 = pneg %p124
      $region46: #{ssa_forward.5} parent=43 // pred_check_branch
        %430 = sbr.rel (%p428) target = $region48
      $region47: #{ssa_forward.5} parent=43 // pred_region
        %p431 = scmp.lt.s32.totalorder %s22, 1
        %s432 = scalar_select %p431, %s22, 1
        %p433 = scmp.lt.s32.totalorder %s23, 0
        %s434 = scalar_select %p433, %s23, 0
        %s435 = smul.addr %s432, 4
        %s436 = sadd.s32 %s434, %s435
        %s437 = smul.addr %s436, 8
        %s438 = scalar_lea.vmem %s3, %s437
      $region48: #{ssa_forward.5} parent=43 // pred_fallthru
        _
      // Predicated region
      $region49: #{ssa_forward.5} parent=43 // pred_check
        %p439 = pneg %p152
      $region50: #{ssa_forward.5} parent=43 // pred_check_branch
        %441 = sbr.rel (%p439) target = $region52
      $region51: #{ssa_forward.5} parent=43 // pred_region
        %p442 = scmp.lt.s32.totalorder %s22, 1
        %s443 = scalar_select %p442, %s22, 1
        %p444 = scmp.lt.s32.totalorder %s23, 0
        %s445 = scalar_select %p444, %s23, 0
        %s446 = smul.addr %s443, 4
        %s447 = sadd.s32 %s445, %s446
        %s448 = smul.addr %s447, 8
        %s449 = scalar_lea.vmem %s4, %s448
      $region52: #{ssa_forward.5} parent=43 // pred_fallthru
        _
    $region44: #{ssa_forward.5} parent=5 // pred_fallthru
      _
  $region6: #{ssa_forward.5} parent=0 // loop_footer
    %s15 = sadd.s32 1, %s11
  $region7: #{ssa_forward.5} parent=0 // loop_footer_branch
    %10 = sbr.rel target = $region3
  $region8: #{ssa_forward.5} parent=0 // loop_exit
    _

</llo_original>
